<compile_context>
chip_gen: v7x
topology: tpu7x:2x2x1
jax: 0.10.0
libtpu: 0.0.40
codegen_flags: <defaults>
</compile_context>

<pallas_src>
import math

import jax
import jax.numpy as jnp
from jax import lax
from jax.experimental import pallas as pl
from jax.experimental.pallas import tpu as pltpu


def _gelu(v, approximate):
    if approximate:
        # tanh-approx GELU: transcendental goes to the EUP slot (relaxed-numerics mode).
        return jax.nn.gelu(v, approximate=True)
    # nn.GELU() default is the exact (erf-based) GELU.
    return 0.5 * v * (1.0 + lax.erf(v / math.sqrt(2.0)))


def _layernorm_fused(x, gamma, beta, eps=1e-5):
    # One-pass LayerNorm (mean + mean-of-squares); clamp variance at 0 to guard
    # against catastrophic cancellation when |mean| >> std.
    mu = jnp.mean(x, axis=-1, keepdims=True)
    ms = jnp.mean(x * x, axis=-1, keepdims=True)
    var = jnp.maximum(ms - mu * mu, 0.0)
    return (x - mu) * lax.rsqrt(var + eps) * gamma + beta


def _make_mixer_kernel(compute_dtype):
    approx = compute_dtype != jnp.float32
    cd = compute_dtype

    def kernel(x_ref,
               g1_ref, b1_ref, g2_ref, b2_ref,
               w1p_ref, bp1_ref, w2p_ref, bp2_ref,
               w1c_ref, bc1_ref, w2c_ref, bc2_ref,
               o_ref):
        Bt, P, E = x_ref.shape
        Pm = w1p_ref.shape[0]
        x = x_ref[...]                                        # (Bt, P, E) f32

        # ---- patch-mixer branch: x + patch_mixer(norm1(x).T).T --------------------
        # Single block-wide contraction over the patch axis (batched; weights kept in
        # PyTorch's (out, in) layout, broadcast once along the batch axis).
        y = _layernorm_fused(x, g1_ref[0], b1_ref[0]).astype(cd)        # (Bt, P, E)
        w1b = jnp.broadcast_to(w1p_ref[...].astype(cd), (Bt, Pm, P))
        h = jnp.einsum('bmp,bpe->bme', w1b, y,
                       preferred_element_type=jnp.float32)              # (Bt, Pm, E)
        h = _gelu(h + bp1_ref[...][None, :, :], approx).astype(cd)
        w2b = jnp.broadcast_to(w2p_ref[...].astype(cd), (Bt, P, Pm))
        r = jnp.einsum('bqm,bme->bqe', w2b, h,
                       preferred_element_type=jnp.float32)              # (Bt, P, E)
        x = x + r + bp2_ref[...][None, :, :]                            # residual #1

        # ---- channel-mixer branch: x + channel_mixer(norm2(x)) --------------------
        # Flatten to (Bt*P, E): one lane-dense matmul pair feeds the MXU with M=Bt*P.
        y2 = _layernorm_fused(x, g2_ref[0], b2_ref[0]).reshape(Bt * P, E).astype(cd)
        h2 = jnp.dot(y2, w1c_ref[...].astype(cd),
                     preferred_element_type=jnp.float32) + bc1_ref[0]
        h2 = _gelu(h2, approx).astype(cd)
        h2 = jnp.dot(h2, w2c_ref[...].astype(cd),
                     preferred_element_type=jnp.float32) + bc2_ref[0]

        o_ref[...] = (x + h2.reshape(Bt, P, E)).astype(o_ref.dtype)     # residual #2

    return kernel


def _vmem_capacity_bytes():
    try:
        cap = int(getattr(pltpu.get_tpu_info(), "vmem_capacity_bytes", 0) or 0)
        if cap > 0:
            return cap
    except Exception:
        pass
    try:
        kind = jax.devices()[0].device_kind.lower()
    except Exception:
        kind = ""
    if "v7" in kind:
        return 64 << 20
    if any(g in kind for g in ("v4", "v5", "v6")):
        return 128 << 20
    return 64 << 20          # unknown generation: assume the smaller (v7x-class) VMEM


def mixer_forward(x, params, *, block_b=None, compute_dtype=jnp.float32,
                  use_buffered_weights=True, alias_input=False):
    """x: (B, P, E) float32. params: dict from make_params()."""
    B, P, E = x.shape
    Pm = params["w1p_t"].shape[0]
    Cm = params["w1c"].shape[1]

    # ---- generation-aware VMEM budget & grid-step goal ------------------------------
    cap = _vmem_capacity_bytes()
    small_vmem = cap <= (64 << 20)                        # v7x-class chip (2 TCs, 64 MiB)
    vmem_budget = min((52 << 20) if small_vmem else (100 << 20), cap - (8 << 20))
    vmem_budget = max(vmem_budget, 32 << 20)
    min_grid_steps = 4 if small_vmem else 1               # >=2 pipelined steps per TC on v7x

    itemsize = 4
    wt_elems = 2 * Pm * P + 2 * E * Cm + Pm + P + Cm + 5 * E
    wt_bufs = 1 if use_buffered_weights else 2

    def est_bytes(bb):
        io = 2 * 2 * bb * P * E                           # x + out blocks, double-buffered
        interm = bb * (6 * P * E + 2 * Pm * E + P * Cm + 2 * Pm * P)
        return (itemsize * (io + wt_bufs * wt_elems + interm) * 3) // 2   # 1.5x headroom

    if block_b is None:
        block_b = min(B, max(1, -(-256 // P)))            # target >=256 MXU rows (block_b*P)
        if min_grid_steps > 1 and B >= min_grid_steps:
            block_b = min(block_b, max(1, B // min_grid_steps))
        while block_b > 1 and est_bytes(block_b) > vmem_budget:
            block_b -= 1
    block_b = max(1, min(block_b, B))
    while B % block_b:                                    # keep the grid exact
        block_b -= 1
    grid = (B // block_b,)

    vmem_limit = int(min(vmem_budget, max(32 << 20, 2 * est_bytes(block_b))))

    def const(shape):
        nd = len(shape)
        idx = lambda i, _nd=nd: (0,) * _nd
        if use_buffered_weights:
            # Constant-index blocks never change across grid steps: single-buffer them.
            return pl.BlockSpec(shape, idx, pipeline_mode=pl.Buffered(1))
        return pl.BlockSpec(shape, idx)

    kernel = _make_mixer_kernel(compute_dtype)

    return pl.pallas_call(
        kernel,
        out_shape=jax.ShapeDtypeStruct((B, P, E), x.dtype),
        grid_spec=pltpu.PrefetchScalarGridSpec(
            num_scalar_prefetch=0,
            grid=grid,
            in_specs=[
                pl.BlockSpec((block_b, P, E), lambda i: (i, 0, 0)),   # x
                const((1, E)), const((1, E)),                         # norm1 gamma/beta
                const((1, E)), const((1, E)),                         # norm2 gamma/beta
                const((Pm, P)), const((Pm, 1)),                       # patch mixer lin1
                const((P, Pm)), const((P, 1)),                        # patch mixer lin2
                const((E, Cm)), const((1, Cm)),                       # channel mixer lin1
                const((Cm, E)), const((1, E)),                        # channel mixer lin2
            ],
            out_specs=pl.BlockSpec((block_b, P, E), lambda i: (i, 0, 0)),
        ),
        compiler_params=pltpu.CompilerParams(
            dimension_semantics=("parallel",),
            vmem_limit_bytes=vmem_limit),
        input_output_aliases=({0: 0} if alias_input else {}),
    )(x,
      params["g1"], params["b1"], params["g2"], params["b2"],
      params["w1p_t"], params["bp1"], params["w2p_t"], params["bp2"],
      params["w1c"], params["bc1"], params["w2c"], params["bc2"])


def mixer_reference(x, p):
    """Pure-JAX reference mirroring the PyTorch forward exactly (with transposes)."""
    def ln(v, g, b, eps=1e-5):
        mu = jnp.mean(v, axis=-1, keepdims=True)
        var = jnp.mean((v - mu) ** 2, axis=-1, keepdims=True)
        return (v - mu) / jnp.sqrt(var + eps) * g + b

    y = ln(x, p["g1"][0], p["b1"][0])
    yt = jnp.swapaxes(y, 1, 2)                                    # (B, E, P)
    h = _gelu(yt @ p["w1p_t"].T + p["bp1"][:, 0], False)          # (B, E, Pm)
    h = h @ p["w2p_t"].T + p["bp2"][:, 0]                         # (B, E, P)
    x = x + jnp.swapaxes(h, 1, 2)
    y2 = ln(x, p["g2"][0], p["b2"][0])
    h2 = _gelu(y2 @ p["w1c"] + p["bc1"][0], False)
    return x + h2 @ p["w2c"] + p["bc2"][0]


def make_params(key, num_patches, embed_dims, patch_expansion, channel_expansion):
    patch_mix = int(patch_expansion * num_patches)
    channel_mix = int(channel_expansion * embed_dims)
    ks = jax.random.split(key, 12)
    rnd = lambda k, shape, scale: (scale * jax.random.normal(k, shape)).astype(jnp.float32)
    return {
        # LayerNorm affine params
        "g1": 1.0 + rnd(ks[0], (1, embed_dims), 0.05),
        "b1": rnd(ks[1], (1, embed_dims), 0.05),
        "g2": 1.0 + rnd(ks[2], (1, embed_dims), 0.05),
        "b2": rnd(ks[3], (1, embed_dims), 0.05),
        # patch mixer: Linear(P -> Pm), Linear(Pm -> P); weights in PyTorch's native
        # (out, in) layout so the kernel contracts over P with NO activation transposes.
        "w1p_t": rnd(ks[4], (patch_mix, num_patches), 1.0 / math.sqrt(num_patches)),
        "bp1": rnd(ks[5], (patch_mix, 1), 0.02),
        "w2p_t": rnd(ks[6], (num_patches, patch_mix), 1.0 / math.sqrt(patch_mix)),
        "bp2": rnd(ks[7], (num_patches, 1), 0.02),
        # channel mixer: Linear(E -> Cm), Linear(Cm -> E); stored (in, out).
        "w1c": rnd(ks[8], (embed_dims, channel_mix), 1.0 / math.sqrt(embed_dims)),
        "bc1": rnd(ks[9], (1, channel_mix), 0.02),
        "w2c": rnd(ks[10], (channel_mix, embed_dims), 1.0 / math.sqrt(channel_mix)),
        "bc2": rnd(ks[11], (1, embed_dims), 0.02),
    }


if __name__ == "__main__":
    B, num_patches, embed_dims = 2, 8, 32
    patch_expansion, channel_expansion = 2.0, 2.0

    key = jax.random.PRNGKey(0)
    kx, kp = jax.random.split(key)
    x = jax.random.normal(kx, (B, num_patches, embed_dims), dtype=jnp.float32)
    params = make_params(kp, num_patches, embed_dims, patch_expansion, channel_expansion)

    try:
        out = jax.block_until_ready(mixer_forward(x, params))
    except Exception:
        # Fallback: some JAX versions reject pipeline_mode=pl.Buffered(1) on
        # constant-index specs; retry with default (double-buffered) weights.
        out = jax.block_until_ready(mixer_forward(x, params, use_buffered_weights=False))

    ref = mixer_reference(x, params)
    assert out.shape == (B, num_patches, embed_dims)
    assert jnp.allclose(out, ref, atol=1e-4, rtol=1e-4), "mismatch vs JAX reference"

    print("KERNEL_OK")
</pallas_src>

<mosaic_0001>
module attributes {stable_mosaic.version = 11 : i64} {
  func.func @kernel(%arg0: i32, %arg1: memref<2x8x32xf32, #tpu.memory_space<vmem>>, %arg2: memref<1x32xf32, #tpu.memory_space<vmem>>, %arg3: memref<1x32xf32, #tpu.memory_space<vmem>>, %arg4: memref<1x32xf32, #tpu.memory_space<vmem>>, %arg5: memref<1x32xf32, #tpu.memory_space<vmem>>, %arg6: memref<16x8xf32, #tpu.memory_space<vmem>>, %arg7: memref<16x1xf32, #tpu.memory_space<vmem>>, %arg8: memref<8x16xf32, #tpu.memory_space<vmem>>, %arg9: memref<8x1xf32, #tpu.memory_space<vmem>>, %arg10: memref<32x64xf32, #tpu.memory_space<vmem>>, %arg11: memref<1x64xf32, #tpu.memory_space<vmem>>, %arg12: memref<64x32xf32, #tpu.memory_space<vmem>>, %arg13: memref<1x32xf32, #tpu.memory_space<vmem>>, %arg14: memref<2x8x32xf32, #tpu.memory_space<vmem>>) attributes {dimension_semantics = [#tpu.dimension_semantics<parallel>], iteration_bounds = array<i64: 1>, scalar_prefetch = 0 : i64, scratch_operands = 0 : i64, tpu.core_type = #tpu.core_type<tc>, window_params = [{transform_indices = @transform_0, window_bounds = array<i64: 2, 8, 32>}, {pipeline_mode = #tpu.pipeline_mode<synchronous>, transform_indices = @transform_1, window_bounds = array<i64: 1, 32>}, {pipeline_mode = #tpu.pipeline_mode<synchronous>, transform_indices = @transform_2, window_bounds = array<i64: 1, 32>}, {pipeline_mode = #tpu.pipeline_mode<synchronous>, transform_indices = @transform_3, window_bounds = array<i64: 1, 32>}, {pipeline_mode = #tpu.pipeline_mode<synchronous>, transform_indices = @transform_4, window_bounds = array<i64: 1, 32>}, {pipeline_mode = #tpu.pipeline_mode<synchronous>, transform_indices = @transform_5, window_bounds = array<i64: 16, 8>}, {pipeline_mode = #tpu.pipeline_mode<synchronous>, transform_indices = @transform_6, window_bounds = array<i64: 16, 1>}, {pipeline_mode = #tpu.pipeline_mode<synchronous>, transform_indices = @transform_7, window_bounds = array<i64: 8, 16>}, {pipeline_mode = #tpu.pipeline_mode<synchronous>, transform_indices = @transform_8, window_bounds = array<i64: 8, 1>}, {pipeline_mode = #tpu.pipeline_mode<synchronous>, transform_indices = @transform_9, window_bounds = array<i64: 32, 64>}, {pipeline_mode = #tpu.pipeline_mode<synchronous>, transform_indices = @transform_10, window_bounds = array<i64: 1, 64>}, {pipeline_mode = #tpu.pipeline_mode<synchronous>, transform_indices = @transform_11, window_bounds = array<i64: 64, 32>}, {pipeline_mode = #tpu.pipeline_mode<synchronous>, transform_indices = @transform_12, window_bounds = array<i64: 1, 32>}, {transform_indices = @transform_13, window_bounds = array<i64: 2, 8, 32>}]} {
    %c0 = arith.constant 0 : index
    %c0_0 = arith.constant 0 : index
    %c0_1 = arith.constant 0 : index
    %0 = vector.load %arg1[%c0, %c0_0, %c0_1] : memref<2x8x32xf32, #tpu.memory_space<vmem>>, vector<2x8x32xf32>
    %c0_2 = arith.constant 0 : index
    %c0_3 = arith.constant 0 : index
    %1 = vector.load %arg2[%c0_2, %c0_3] : memref<1x32xf32, #tpu.memory_space<vmem>>, vector<1x32xf32>
    %2 = vector.shape_cast %1 : vector<1x32xf32> to vector<32xf32>
    %c0_4 = arith.constant 0 : index
    %c0_5 = arith.constant 0 : index
    %3 = vector.load %arg3[%c0_4, %c0_5] : memref<1x32xf32, #tpu.memory_space<vmem>>, vector<1x32xf32>
    %4 = vector.shape_cast %3 : vector<1x32xf32> to vector<32xf32>
    %cst = arith.constant dense<0.000000e+00> : vector<2x8xf32>
    %5 = vector.multi_reduction <add>, %0, %cst [2] : vector<2x8x32xf32> to vector<2x8xf32>
    %6 = vector.shape_cast %5 : vector<2x8xf32> to vector<2x8x1xf32>
    %cst_6 = arith.constant 3.200000e+01 : f32
    %7 = vector.broadcast %cst_6 : f32 to vector<2x8x1xf32>
    %8 = arith.divf %6, %7 : vector<2x8x1xf32>
    %9 = arith.mulf %0, %0 : vector<2x8x32xf32>
    %cst_7 = arith.constant dense<0.000000e+00> : vector<2x8xf32>
    %10 = vector.multi_reduction <add>, %9, %cst_7 [2] : vector<2x8x32xf32> to vector<2x8xf32>
    %11 = vector.shape_cast %10 : vector<2x8xf32> to vector<2x8x1xf32>
    %cst_8 = arith.constant 3.200000e+01 : f32
    %12 = vector.broadcast %cst_8 : f32 to vector<2x8x1xf32>
    %13 = arith.divf %11, %12 : vector<2x8x1xf32>
    %14 = arith.mulf %8, %8 : vector<2x8x1xf32>
    %15 = arith.subf %13, %14 : vector<2x8x1xf32>
    %cst_9 = arith.constant 0.000000e+00 : f32
    %16 = vector.broadcast %cst_9 : f32 to vector<2x8x1xf32>
    %17 = arith.maximumf %15, %16 : vector<2x8x1xf32>
    %18 = vector.broadcast %8 : vector<2x8x1xf32> to vector<2x8x32xf32>
    %19 = arith.subf %0, %18 : vector<2x8x32xf32>
    %cst_10 = arith.constant 9.99999974E-6 : f32
    %20 = vector.broadcast %cst_10 : f32 to vector<2x8x1xf32>
    %21 = arith.addf %17, %20 : vector<2x8x1xf32>
    %22 = math.rsqrt %21 : vector<2x8x1xf32>
    %23 = vector.broadcast %22 : vector<2x8x1xf32> to vector<2x8x32xf32>
    %24 = arith.mulf %19, %23 : vector<2x8x32xf32>
    %25 = vector.shape_cast %2 : vector<32xf32> to vector<1x1x32xf32>
    %26 = vector.broadcast %25 : vector<1x1x32xf32> to vector<2x8x32xf32>
    %27 = arith.mulf %24, %26 : vector<2x8x32xf32>
    %28 = vector.shape_cast %4 : vector<32xf32> to vector<1x1x32xf32>
    %29 = vector.broadcast %28 : vector<1x1x32xf32> to vector<2x8x32xf32>
    %30 = arith.addf %27, %29 : vector<2x8x32xf32>
    %c0_11 = arith.constant 0 : index
    %c0_12 = arith.constant 0 : index
    %31 = vector.load %arg6[%c0_11, %c0_12] : memref<16x8xf32, #tpu.memory_space<vmem>>, vector<16x8xf32>
    %32 = vector.shape_cast %31 : vector<16x8xf32> to vector<1x16x8xf32>
    %33 = vector.broadcast %32 : vector<1x16x8xf32> to vector<2x16x8xf32>
    "tpu.trace_start"() <{level = 10 : i32, message = "bmp,bpe->bme"}> : () -> ()
    %cst_13 = arith.constant dense<0.000000e+00> : vector<2x16x32xf32>
    %34 = tpu.matmul %33, %30, %cst_13 {dimension_numbers = #tpu.dot_dimension_numbers<[2], [1], [1], [2], [0, 0, 0, 1, 1, 2], [0], [0]>} : vector<2x16x8xf32>, vector<2x8x32xf32>, vector<2x16x32xf32> -> vector<2x16x32xf32>
    "tpu.trace_stop"() : () -> ()
    %c0_14 = arith.constant 0 : index
    %c0_15 = arith.constant 0 : index
    %35 = vector.load %arg7[%c0_14, %c0_15] : memref<16x1xf32, #tpu.memory_space<vmem>>, vector<16x1xf32>
    %36 = vector.shape_cast %35 : vector<16x1xf32> to vector<1x16x1xf32>
    %37 = vector.broadcast %36 : vector<1x16x1xf32> to vector<2x16x32xf32>
    %38 = arith.addf %34, %37 : vector<2x16x32xf32>
    %cst_16 = arith.constant 5.000000e-01 : f32
    %39 = vector.broadcast %cst_16 : f32 to vector<2x16x32xf32>
    %40 = arith.mulf %39, %38 : vector<2x16x32xf32>
    %cst_17 = arith.constant 1.41421354 : f32
    %41 = vector.broadcast %cst_17 : f32 to vector<2x16x32xf32>
    %42 = arith.divf %38, %41 : vector<2x16x32xf32>
    %43 = math.erf %42 : vector<2x16x32xf32>
    %cst_18 = arith.constant 1.000000e+00 : f32
    %44 = vector.broadcast %cst_18 : f32 to vector<2x16x32xf32>
    %45 = arith.addf %44, %43 : vector<2x16x32xf32>
    %46 = arith.mulf %40, %45 : vector<2x16x32xf32>
    %c0_19 = arith.constant 0 : index
    %c0_20 = arith.constant 0 : index
    %47 = vector.load %arg8[%c0_19, %c0_20] : memref<8x16xf32, #tpu.memory_space<vmem>>, vector<8x16xf32>
    %48 = vector.shape_cast %47 : vector<8x16xf32> to vector<1x8x16xf32>
    %49 = vector.broadcast %48 : vector<1x8x16xf32> to vector<2x8x16xf32>
    "tpu.trace_start"() <{level = 10 : i32, message = "bqm,bme->bqe"}> : () -> ()
    %cst_21 = arith.constant dense<0.000000e+00> : vector<2x8x32xf32>
    %50 = tpu.matmul %49, %46, %cst_21 {dimension_numbers = #tpu.dot_dimension_numbers<[2], [1], [1], [2], [0, 0, 0, 1, 1, 2], [0], [0]>} : vector<2x8x16xf32>, vector<2x16x32xf32>, vector<2x8x32xf32> -> vector<2x8x32xf32>
    "tpu.trace_stop"() : () -> ()
    %51 = arith.addf %0, %50 : vector<2x8x32xf32>
    %c0_22 = arith.constant 0 : index
    %c0_23 = arith.constant 0 : index
    %52 = vector.load %arg9[%c0_22, %c0_23] : memref<8x1xf32, #tpu.memory_space<vmem>>, vector<8x1xf32>
    %53 = vector.shape_cast %52 : vector<8x1xf32> to vector<1x8x1xf32>
    %54 = vector.broadcast %53 : vector<1x8x1xf32> to vector<2x8x32xf32>
    %55 = arith.addf %51, %54 : vector<2x8x32xf32>
    %c0_24 = arith.constant 0 : index
    %c0_25 = arith.constant 0 : index
    %56 = vector.load %arg4[%c0_24, %c0_25] : memref<1x32xf32, #tpu.memory_space<vmem>>, vector<1x32xf32>
    %57 = vector.shape_cast %56 : vector<1x32xf32> to vector<32xf32>
    %c0_26 = arith.constant 0 : index
    %c0_27 = arith.constant 0 : index
    %58 = vector.load %arg5[%c0_26, %c0_27] : memref<1x32xf32, #tpu.memory_space<vmem>>, vector<1x32xf32>
    %59 = vector.shape_cast %58 : vector<1x32xf32> to vector<32xf32>
    %cst_28 = arith.constant dense<0.000000e+00> : vector<2x8xf32>
    %60 = vector.multi_reduction <add>, %55, %cst_28 [2] : vector<2x8x32xf32> to vector<2x8xf32>
    %61 = vector.shape_cast %60 : vector<2x8xf32> to vector<2x8x1xf32>
    %cst_29 = arith.constant 3.200000e+01 : f32
    %62 = vector.broadcast %cst_29 : f32 to vector<2x8x1xf32>
    %63 = arith.divf %61, %62 : vector<2x8x1xf32>
    %64 = arith.mulf %55, %55 : vector<2x8x32xf32>
    %cst_30 = arith.constant dense<0.000000e+00> : vector<2x8xf32>
    %65 = vector.multi_reduction <add>, %64, %cst_30 [2] : vector<2x8x32xf32> to vector<2x8xf32>
    %66 = vector.shape_cast %65 : vector<2x8xf32> to vector<2x8x1xf32>
    %cst_31 = arith.constant 3.200000e+01 : f32
    %67 = vector.broadcast %cst_31 : f32 to vector<2x8x1xf32>
    %68 = arith.divf %66, %67 : vector<2x8x1xf32>
    %69 = arith.mulf %63, %63 : vector<2x8x1xf32>
    %70 = arith.subf %68, %69 : vector<2x8x1xf32>
    %cst_32 = arith.constant 0.000000e+00 : f32
    %71 = vector.broadcast %cst_32 : f32 to vector<2x8x1xf32>
    %72 = arith.maximumf %70, %71 : vector<2x8x1xf32>
    %73 = vector.broadcast %63 : vector<2x8x1xf32> to vector<2x8x32xf32>
    %74 = arith.subf %55, %73 : vector<2x8x32xf32>
    %cst_33 = arith.constant 9.99999974E-6 : f32
    %75 = vector.broadcast %cst_33 : f32 to vector<2x8x1xf32>
    %76 = arith.addf %72, %75 : vector<2x8x1xf32>
    %77 = math.rsqrt %76 : vector<2x8x1xf32>
    %78 = vector.broadcast %77 : vector<2x8x1xf32> to vector<2x8x32xf32>
    %79 = arith.mulf %74, %78 : vector<2x8x32xf32>
    %80 = vector.shape_cast %57 : vector<32xf32> to vector<1x1x32xf32>
    %81 = vector.broadcast %80 : vector<1x1x32xf32> to vector<2x8x32xf32>
    %82 = arith.mulf %79, %81 : vector<2x8x32xf32>
    %83 = vector.shape_cast %59 : vector<32xf32> to vector<1x1x32xf32>
    %84 = vector.broadcast %83 : vector<1x1x32xf32> to vector<2x8x32xf32>
    %85 = arith.addf %82, %84 : vector<2x8x32xf32>
    %86 = vector.shape_cast %85 : vector<2x8x32xf32> to vector<16x32xf32>
    %c0_34 = arith.constant 0 : index
    %c0_35 = arith.constant 0 : index
    %87 = vector.load %arg10[%c0_34, %c0_35] : memref<32x64xf32, #tpu.memory_space<vmem>>, vector<32x64xf32>
    %cst_36 = arith.constant dense<0.000000e+00> : vector<16x64xf32>
    %88 = tpu.matmul %86, %87, %cst_36 {dimension_numbers = #tpu.dot_dimension_numbers<[1], [0], [0], [1], [0, 0, 1, 1], [], []>} : vector<16x32xf32>, vector<32x64xf32>, vector<16x64xf32> -> vector<16x64xf32>
    %c0_37 = arith.constant 0 : index
    %c0_38 = arith.constant 0 : index
    %89 = vector.load %arg11[%c0_37, %c0_38] : memref<1x64xf32, #tpu.memory_space<vmem>>, vector<1x64xf32>
    %90 = vector.shape_cast %89 : vector<1x64xf32> to vector<64xf32>
    %91 = vector.shape_cast %90 : vector<64xf32> to vector<1x64xf32>
    %92 = vector.broadcast %91 : vector<1x64xf32> to vector<16x64xf32>
    %93 = arith.addf %88, %92 : vector<16x64xf32>
    %cst_39 = arith.constant 5.000000e-01 : f32
    %94 = vector.broadcast %cst_39 : f32 to vector<16x64xf32>
    %95 = arith.mulf %94, %93 : vector<16x64xf32>
    %cst_40 = arith.constant 1.41421354 : f32
    %96 = vector.broadcast %cst_40 : f32 to vector<16x64xf32>
    %97 = arith.divf %93, %96 : vector<16x64xf32>
    %98 = math.erf %97 : vector<16x64xf32>
    %cst_41 = arith.constant 1.000000e+00 : f32
    %99 = vector.broadcast %cst_41 : f32 to vector<16x64xf32>
    %100 = arith.addf %99, %98 : vector<16x64xf32>
    %101 = arith.mulf %95, %100 : vector<16x64xf32>
    %c0_42 = arith.constant 0 : index
    %c0_43 = arith.constant 0 : index
    %102 = vector.load %arg12[%c0_42, %c0_43] : memref<64x32xf32, #tpu.memory_space<vmem>>, vector<64x32xf32>
    %cst_44 = arith.constant dense<0.000000e+00> : vector<16x32xf32>
    %103 = tpu.matmul %101, %102, %cst_44 {dimension_numbers = #tpu.dot_dimension_numbers<[1], [0], [0], [1], [0, 0, 1, 1], [], []>} : vector<16x64xf32>, vector<64x32xf32>, vector<16x32xf32> -> vector<16x32xf32>
    %c0_45 = arith.constant 0 : index
    %c0_46 = arith.constant 0 : index
    %104 = vector.load %arg13[%c0_45, %c0_46] : memref<1x32xf32, #tpu.memory_space<vmem>>, vector<1x32xf32>
    %105 = vector.shape_cast %104 : vector<1x32xf32> to vector<32xf32>
    %106 = vector.shape_cast %105 : vector<32xf32> to vector<1x32xf32>
    %107 = vector.broadcast %106 : vector<1x32xf32> to vector<16x32xf32>
    %108 = arith.addf %103, %107 : vector<16x32xf32>
    %109 = vector.shape_cast %108 : vector<16x32xf32> to vector<2x8x32xf32>
    %110 = arith.addf %55, %109 : vector<2x8x32xf32>
    %c0_47 = arith.constant 0 : index
    %c0_48 = arith.constant 0 : index
    %c0_49 = arith.constant 0 : index
    %111 = vector.load %arg14[%c0_47, %c0_48, %c0_49] : memref<2x8x32xf32, #tpu.memory_space<vmem>>, vector<2x8x32xf32>
    tpu.vector_store %arg14[%c0_47, %c0_48, %c0_49], %110 {strides = array<i32>} : memref<2x8x32xf32, #tpu.memory_space<vmem>>, vector<2x8x32xf32>,
    return
  }
  func.func @transform_0(%arg0: i32) -> (i32, i32, i32) {
    %c0_i32 = arith.constant 0 : i32
    %c0_i32_0 = arith.constant 0 : i32
    %c0_i32_1 = arith.constant 0 : i32
    return %arg0, %c0_i32, %c0_i32_0 : i32, i32, i32
  }
  func.func @transform_1(%arg0: i32) -> (i32, i32) {
    %c0_i32 = arith.constant 0 : i32
    %c0_i32_0 = arith.constant 0 : i32
    %c0_i32_1 = arith.constant 0 : i32
    return %c0_i32, %c0_i32_0 : i32, i32
  }
  func.func @transform_2(%arg0: i32) -> (i32, i32) {
    %c0_i32 = arith.constant 0 : i32
    %c0_i32_0 = arith.constant 0 : i32
    %c0_i32_1 = arith.constant 0 : i32
    return %c0_i32, %c0_i32_0 : i32, i32
  }
  func.func @transform_3(%arg0: i32) -> (i32, i32) {
    %c0_i32 = arith.constant 0 : i32
    %c0_i32_0 = arith.constant 0 : i32
    %c0_i32_1 = arith.constant 0 : i32
    return %c0_i32, %c0_i32_0 : i32, i32
  }
  func.func @transform_4(%arg0: i32) -> (i32, i32) {
    %c0_i32 = arith.constant 0 : i32
    %c0_i32_0 = arith.constant 0 : i32
    %c0_i32_1 = arith.constant 0 : i32
    return %c0_i32, %c0_i32_0 : i32, i32
  }
  func.func @transform_5(%arg0: i32) -> (i32, i32) {
    %c0_i32 = arith.constant 0 : i32
    %c0_i32_0 = arith.constant 0 : i32
    %c0_i32_1 = arith.constant 0 : i32
    return %c0_i32, %c0_i32_0 : i32, i32
  }
  func.func @transform_6(%arg0: i32) -> (i32, i32) {
    %c0_i32 = arith.constant 0 : i32
    %c0_i32_0 = arith.constant 0 : i32
    %c0_i32_1 = arith.constant 0 : i32
    return %c0_i32, %c0_i32_0 : i32, i32
  }
  func.func @transform_7(%arg0: i32) -> (i32, i32) {
    %c0_i32 = arith.constant 0 : i32
    %c0_i32_0 = arith.constant 0 : i32
    %c0_i32_1 = arith.constant 0 : i32
    return %c0_i32, %c0_i32_0 : i32, i32
  }
  func.func @transform_8(%arg0: i32) -> (i32, i32) {
    %c0_i32 = arith.constant 0 : i32
    %c0_i32_0 = arith.constant 0 : i32
    %c0_i32_1 = arith.constant 0 : i32
    return %c0_i32, %c0_i32_0 : i32, i32
  }
  func.func @transform_9(%arg0: i32) -> (i32, i32) {
    %c0_i32 = arith.constant 0 : i32
    %c0_i32_0 = arith.constant 0 : i32
    %c0_i32_1 = arith.constant 0 : i32
    return %c0_i32, %c0_i32_0 : i32, i32
  }
  func.func @transform_10(%arg0: i32) -> (i32, i32) {
    %c0_i32 = arith.constant 0 : i32
    %c0_i32_0 = arith.constant 0 : i32
    %c0_i32_1 = arith.constant 0 : i32
    return %c0_i32, %c0_i32_0 : i32, i32
  }
  func.func @transform_11(%arg0: i32) -> (i32, i32) {
    %c0_i32 = arith.constant 0 : i32
    %c0_i32_0 = arith.constant 0 : i32
    %c0_i32_1 = arith.constant 0 : i32
    return %c0_i32, %c0_i32_0 : i32, i32
  }
  func.func @transform_12(%arg0: i32) -> (i32, i32) {
    %c0_i32 = arith.constant 0 : i32
    %c0_i32_0 = arith.constant 0 : i32
    %c0_i32_1 = arith.constant 0 : i32
    return %c0_i32, %c0_i32_0 : i32, i32
  }
  func.func @transform_13(%arg0: i32) -> (i32, i32, i32) {
    %c0_i32 = arith.constant 0 : i32
    %c0_i32_0 = arith.constant 0 : i32
    %c0_i32_1 = arith.constant 0 : i32
    return %arg0, %c0_i32, %c0_i32_0 : i32, i32, i32
  }
}

module attributes {stable_mosaic.version = 11 : i64} {
  func.func @kernel(%arg0: i32, %arg1: memref<2x8x32xf32, #tpu.memory_space<vmem>>, %arg2: memref<1x32xf32, #tpu.memory_space<vmem>>, %arg3: memref<1x32xf32, #tpu.memory_space<vmem>>, %arg4: memref<1x32xf32, #tpu.memory_space<vmem>>, %arg5: memref<1x32xf32, #tpu.memory_space<vmem>>, %arg6: memref<16x8xf32, #tpu.memory_space<vmem>>, %arg7: memref<16x1xf32, #tpu.memory_space<vmem>>, %arg8: memref<8x16xf32, #tpu.memory_space<vmem>>, %arg9: memref<8x1xf32, #tpu.memory_space<vmem>>, %arg10: memref<32x64xf32, #tpu.memory_space<vmem>>, %arg11: memref<1x64xf32, #tpu.memory_space<vmem>>, %arg12: memref<64x32xf32, #tpu.memory_space<vmem>>, %arg13: memref<1x32xf32, #tpu.memory_space<vmem>>, %arg14: memref<2x8x32xf32, #tpu.memory_space<vmem>>) attributes {dimension_semantics = [#tpu.dimension_semantics<parallel>], iteration_bounds = array<i64: 1>, scalar_prefetch = 0 : i64, scratch_operands = 0 : i64, tpu.core_type = #tpu.core_type<tc>, window_params = [{transform_indices = @transform_0, window_bounds = array<i64: 2, 8, 32>}, {pipeline_mode = #tpu.pipeline_mode<synchronous>, transform_indices = @transform_1, window_bounds = array<i64: 1, 32>}, {pipeline_mode = #tpu.pipeline_mode<synchronous>, transform_indices = @transform_2, window_bounds = array<i64: 1, 32>}, {pipeline_mode = #tpu.pipeline_mode<synchronous>, transform_indices = @transform_3, window_bounds = array<i64: 1, 32>}, {pipeline_mode = #tpu.pipeline_mode<synchronous>, transform_indices = @transform_4, window_bounds = array<i64: 1, 32>}, {pipeline_mode = #tpu.pipeline_mode<synchronous>, transform_indices = @transform_5, window_bounds = array<i64: 16, 8>}, {pipeline_mode = #tpu.pipeline_mode<synchronous>, transform_indices = @transform_6, window_bounds = array<i64: 16, 1>}, {pipeline_mode = #tpu.pipeline_mode<synchronous>, transform_indices = @transform_7, window_bounds = array<i64: 8, 16>}, {pipeline_mode = #tpu.pipeline_mode<synchronous>, transform_indices = @transform_8, window_bounds = array<i64: 8, 1>}, {pipeline_mode = #tpu.pipeline_mode<synchronous>, transform_indices = @transform_9, window_bounds = array<i64: 32, 64>}, {pipeline_mode = #tpu.pipeline_mode<synchronous>, transform_indices = @transform_10, window_bounds = array<i64: 1, 64>}, {pipeline_mode = #tpu.pipeline_mode<synchronous>, transform_indices = @transform_11, window_bounds = array<i64: 64, 32>}, {pipeline_mode = #tpu.pipeline_mode<synchronous>, transform_indices = @transform_12, window_bounds = array<i64: 1, 32>}, {transform_indices = @transform_13, window_bounds = array<i64: 2, 8, 32>}]} {
    %c0 = arith.constant 0 : index
    %c0_0 = arith.constant 0 : index
    %c0_1 = arith.constant 0 : index
    %0 = vector.load %arg1[%c0, %c0_0, %c0_1] : memref<2x8x32xf32, #tpu.memory_space<vmem>>, vector<2x8x32xf32>
    %c0_2 = arith.constant 0 : index
    %c0_3 = arith.constant 0 : index
    %1 = vector.load %arg2[%c0_2, %c0_3] : memref<1x32xf32, #tpu.memory_space<vmem>>, vector<1x32xf32>
    %2 = vector.shape_cast %1 : vector<1x32xf32> to vector<32xf32>
    %c0_4 = arith.constant 0 : index
    %c0_5 = arith.constant 0 : index
    %3 = vector.load %arg3[%c0_4, %c0_5] : memref<1x32xf32, #tpu.memory_space<vmem>>, vector<1x32xf32>
    %4 = vector.shape_cast %3 : vector<1x32xf32> to vector<32xf32>
    %cst = arith.constant dense<0.000000e+00> : vector<2x8xf32>
    %5 = vector.multi_reduction <add>, %0, %cst [2] : vector<2x8x32xf32> to vector<2x8xf32>
    %6 = vector.shape_cast %5 : vector<2x8xf32> to vector<2x8x1xf32>
    %cst_6 = arith.constant 3.200000e+01 : f32
    %7 = vector.broadcast %cst_6 : f32 to vector<2x8x1xf32>
    %8 = arith.divf %6, %7 : vector<2x8x1xf32>
    %9 = arith.mulf %0, %0 : vector<2x8x32xf32>
    %cst_7 = arith.constant dense<0.000000e+00> : vector<2x8xf32>
    %10 = vector.multi_reduction <add>, %9, %cst_7 [2] : vector<2x8x32xf32> to vector<2x8xf32>
    %11 = vector.shape_cast %10 : vector<2x8xf32> to vector<2x8x1xf32>
    %cst_8 = arith.constant 3.200000e+01 : f32
    %12 = vector.broadcast %cst_8 : f32 to vector<2x8x1xf32>
    %13 = arith.divf %11, %12 : vector<2x8x1xf32>
    %14 = arith.mulf %8, %8 : vector<2x8x1xf32>
    %15 = arith.subf %13, %14 : vector<2x8x1xf32>
    %cst_9 = arith.constant 0.000000e+00 : f32
    %16 = vector.broadcast %cst_9 : f32 to vector<2x8x1xf32>
    %17 = arith.maximumf %15, %16 : vector<2x8x1xf32>
    %18 = vector.broadcast %8 : vector<2x8x1xf32> to vector<2x8x32xf32>
    %19 = arith.subf %0, %18 : vector<2x8x32xf32>
    %cst_10 = arith.constant 9.99999974E-6 : f32
    %20 = vector.broadcast %cst_10 : f32 to vector<2x8x1xf32>
    %21 = arith.addf %17, %20 : vector<2x8x1xf32>
    %22 = math.rsqrt %21 : vector<2x8x1xf32>
    %23 = vector.broadcast %22 : vector<2x8x1xf32> to vector<2x8x32xf32>
    %24 = arith.mulf %19, %23 : vector<2x8x32xf32>
    %25 = vector.shape_cast %2 : vector<32xf32> to vector<1x1x32xf32>
    %26 = vector.broadcast %25 : vector<1x1x32xf32> to vector<2x8x32xf32>
    %27 = arith.mulf %24, %26 : vector<2x8x32xf32>
    %28 = vector.shape_cast %4 : vector<32xf32> to vector<1x1x32xf32>
    %29 = vector.broadcast %28 : vector<1x1x32xf32> to vector<2x8x32xf32>
    %30 = arith.addf %27, %29 : vector<2x8x32xf32>
    %c0_11 = arith.constant 0 : index
    %c0_12 = arith.constant 0 : index
    %31 = vector.load %arg6[%c0_11, %c0_12] : memref<16x8xf32, #tpu.memory_space<vmem>>, vector<16x8xf32>
    %32 = vector.shape_cast %31 : vector<16x8xf32> to vector<1x16x8xf32>
    %33 = vector.broadcast %32 : vector<1x16x8xf32> to vector<2x16x8xf32>
    "tpu.trace_start"() <{level = 10 : i32, message = "bmp,bpe->bme"}> : () -> ()
    %cst_13 = arith.constant dense<0.000000e+00> : vector<2x16x32xf32>
    %34 = tpu.matmul %33, %30, %cst_13 {dimension_numbers = #tpu.dot_dimension_numbers<[2], [1], [1], [2], [0, 0, 0, 1, 1, 2], [0], [0]>} : vector<2x16x8xf32>, vector<2x8x32xf32>, vector<2x16x32xf32> -> vector<2x16x32xf32>
    "tpu.trace_stop"() : () -> ()
    %c0_14 = arith.constant 0 : index
    %c0_15 = arith.constant 0 : index
    %35 = vector.load %arg7[%c0_14, %c0_15] : memref<16x1xf32, #tpu.memory_space<vmem>>, vector<16x1xf32>
    %36 = vector.shape_cast %35 : vector<16x1xf32> to vector<1x16x1xf32>
    %37 = vector.broadcast %36 : vector<1x16x1xf32> to vector<2x16x32xf32>
    %38 = arith.addf %34, %37 : vector<2x16x32xf32>
    %cst_16 = arith.constant 5.000000e-01 : f32
    %39 = vector.broadcast %cst_16 : f32 to vector<2x16x32xf32>
    %40 = arith.mulf %39, %38 : vector<2x16x32xf32>
    %cst_17 = arith.constant 1.41421354 : f32
    %41 = vector.broadcast %cst_17 : f32 to vector<2x16x32xf32>
    %42 = arith.divf %38, %41 : vector<2x16x32xf32>
    %43 = math.erf %42 : vector<2x16x32xf32>
    %cst_18 = arith.constant 1.000000e+00 : f32
    %44 = vector.broadcast %cst_18 : f32 to vector<2x16x32xf32>
    %45 = arith.addf %44, %43 : vector<2x16x32xf32>
    %46 = arith.mulf %40, %45 : vector<2x16x32xf32>
    %c0_19 = arith.constant 0 : index
    %c0_20 = arith.constant 0 : index
    %47 = vector.load %arg8[%c0_19, %c0_20] : memref<8x16xf32, #tpu.memory_space<vmem>>, vector<8x16xf32>
    %48 = vector.shape_cast %47 : vector<8x16xf32> to vector<1x8x16xf32>
    %49 = vector.broadcast %48 : vector<1x8x16xf32> to vector<2x8x16xf32>
    "tpu.trace_start"() <{level = 10 : i32, message = "bqm,bme->bqe"}> : () -> ()
    %cst_21 = arith.constant dense<0.000000e+00> : vector<2x8x32xf32>
    %50 = tpu.matmul %49, %46, %cst_21 {dimension_numbers = #tpu.dot_dimension_numbers<[2], [1], [1], [2], [0, 0, 0, 1, 1, 2], [0], [0]>} : vector<2x8x16xf32>, vector<2x16x32xf32>, vector<2x8x32xf32> -> vector<2x8x32xf32>
    "tpu.trace_stop"() : () -> ()
    %51 = arith.addf %0, %50 : vector<2x8x32xf32>
    %c0_22 = arith.constant 0 : index
    %c0_23 = arith.constant 0 : index
    %52 = vector.load %arg9[%c0_22, %c0_23] : memref<8x1xf32, #tpu.memory_space<vmem>>, vector<8x1xf32>
    %53 = vector.shape_cast %52 : vector<8x1xf32> to vector<1x8x1xf32>
    %54 = vector.broadcast %53 : vector<1x8x1xf32> to vector<2x8x32xf32>
    %55 = arith.addf %51, %54 : vector<2x8x32xf32>
    %c0_24 = arith.constant 0 : index
    %c0_25 = arith.constant 0 : index
    %56 = vector.load %arg4[%c0_24, %c0_25] : memref<1x32xf32, #tpu.memory_space<vmem>>, vector<1x32xf32>
    %57 = vector.shape_cast %56 : vector<1x32xf32> to vector<32xf32>
    %c0_26 = arith.constant 0 : index
    %c0_27 = arith.constant 0 : index
    %58 = vector.load %arg5[%c0_26, %c0_27] : memref<1x32xf32, #tpu.memory_space<vmem>>, vector<1x32xf32>
    %59 = vector.shape_cast %58 : vector<1x32xf32> to vector<32xf32>
    %cst_28 = arith.constant dense<0.000000e+00> : vector<2x8xf32>
    %60 = vector.multi_reduction <add>, %55, %cst_28 [2] : vector<2x8x32xf32> to vector<2x8xf32>
    %61 = vector.shape_cast %60 : vector<2x8xf32> to vector<2x8x1xf32>
    %cst_29 = arith.constant 3.200000e+01 : f32
    %62 = vector.broadcast %cst_29 : f32 to vector<2x8x1xf32>
    %63 = arith.divf %61, %62 : vector<2x8x1xf32>
    %64 = arith.mulf %55, %55 : vector<2x8x32xf32>
    %cst_30 = arith.constant dense<0.000000e+00> : vector<2x8xf32>
    %65 = vector.multi_reduction <add>, %64, %cst_30 [2] : vector<2x8x32xf32> to vector<2x8xf32>
    %66 = vector.shape_cast %65 : vector<2x8xf32> to vector<2x8x1xf32>
    %cst_31 = arith.constant 3.200000e+01 : f32
    %67 = vector.broadcast %cst_31 : f32 to vector<2x8x1xf32>
    %68 = arith.divf %66, %67 : vector<2x8x1xf32>
    %69 = arith.mulf %63, %63 : vector<2x8x1xf32>
    %70 = arith.subf %68, %69 : vector<2x8x1xf32>
    %cst_32 = arith.constant 0.000000e+00 : f32
    %71 = vector.broadcast %cst_32 : f32 to vector<2x8x1xf32>
    %72 = arith.maximumf %70, %71 : vector<2x8x1xf32>
    %73 = vector.broadcast %63 : vector<2x8x1xf32> to vector<2x8x32xf32>
    %74 = arith.subf %55, %73 : vector<2x8x32xf32>
    %cst_33 = arith.constant 9.99999974E-6 : f32
    %75 = vector.broadcast %cst_33 : f32 to vector<2x8x1xf32>
    %76 = arith.addf %72, %75 : vector<2x8x1xf32>
    %77 = math.rsqrt %76 : vector<2x8x1xf32>
    %78 = vector.broadcast %77 : vector<2x8x1xf32> to vector<2x8x32xf32>
    %79 = arith.mulf %74, %78 : vector<2x8x32xf32>
    %80 = vector.shape_cast %57 : vector<32xf32> to vector<1x1x32xf32>
    %81 = vector.broadcast %80 : vector<1x1x32xf32> to vector<2x8x32xf32>
    %82 = arith.mulf %79, %81 : vector<2x8x32xf32>
    %83 = vector.shape_cast %59 : vector<32xf32> to vector<1x1x32xf32>
    %84 = vector.broadcast %83 : vector<1x1x32xf32> to vector<2x8x32xf32>
    %85 = arith.addf %82, %84 : vector<2x8x32xf32>
    %86 = vector.shape_cast %85 : vector<2x8x32xf32> to vector<16x32xf32>
    %c0_34 = arith.constant 0 : index
    %c0_35 = arith.constant 0 : index
    %87 = vector.load %arg10[%c0_34, %c0_35] : memref<32x64xf32, #tpu.memory_space<vmem>>, vector<32x64xf32>
    %cst_36 = arith.constant dense<0.000000e+00> : vector<16x64xf32>
    %88 = tpu.matmul %86, %87, %cst_36 {dimension_numbers = #tpu.dot_dimension_numbers<[1], [0], [0], [1], [0, 0, 1, 1], [], []>} : vector<16x32xf32>, vector<32x64xf32>, vector<16x64xf32> -> vector<16x64xf32>
    %c0_37 = arith.constant 0 : index
    %c0_38 = arith.constant 0 : index
    %89 = vector.load %arg11[%c0_37, %c0_38] : memref<1x64xf32, #tpu.memory_space<vmem>>, vector<1x64xf32>
    %90 = vector.shape_cast %89 : vector<1x64xf32> to vector<64xf32>
    %91 = vector.shape_cast %90 : vector<64xf32> to vector<1x64xf32>
    %92 = vector.broadcast %91 : vector<1x64xf32> to vector<16x64xf32>
    %93 = arith.addf %88, %92 : vector<16x64xf32>
    %cst_39 = arith.constant 5.000000e-01 : f32
    %94 = vector.broadcast %cst_39 : f32 to vector<16x64xf32>
    %95 = arith.mulf %94, %93 : vector<16x64xf32>
    %cst_40 = arith.constant 1.41421354 : f32
    %96 = vector.broadcast %cst_40 : f32 to vector<16x64xf32>
    %97 = arith.divf %93, %96 : vector<16x64xf32>
    %98 = math.erf %97 : vector<16x64xf32>
    %cst_41 = arith.constant 1.000000e+00 : f32
    %99 = vector.broadcast %cst_41 : f32 to vector<16x64xf32>
    %100 = arith.addf %99, %98 : vector<16x64xf32>
    %101 = arith.mulf %95, %100 : vector<16x64xf32>
    %c0_42 = arith.constant 0 : index
    %c0_43 = arith.constant 0 : index
    %102 = vector.load %arg12[%c0_42, %c0_43] : memref<64x32xf32, #tpu.memory_space<vmem>>, vector<64x32xf32>
    %cst_44 = arith.constant dense<0.000000e+00> : vector<16x32xf32>
    %103 = tpu.matmul %101, %102, %cst_44 {dimension_numbers = #tpu.dot_dimension_numbers<[1], [0], [0], [1], [0, 0, 1, 1], [], []>} : vector<16x64xf32>, vector<64x32xf32>, vector<16x32xf32> -> vector<16x32xf32>
    %c0_45 = arith.constant 0 : index
    %c0_46 = arith.constant 0 : index
    %104 = vector.load %arg13[%c0_45, %c0_46] : memref<1x32xf32, #tpu.memory_space<vmem>>, vector<1x32xf32>
    %105 = vector.shape_cast %104 : vector<1x32xf32> to vector<32xf32>
    %106 = vector.shape_cast %105 : vector<32xf32> to vector<1x32xf32>
    %107 = vector.broadcast %106 : vector<1x32xf32> to vector<16x32xf32>
    %108 = arith.addf %103, %107 : vector<16x32xf32>
    %109 = vector.shape_cast %108 : vector<16x32xf32> to vector<2x8x32xf32>
    %110 = arith.addf %55, %109 : vector<2x8x32xf32>
    %c0_47 = arith.constant 0 : index
    %c0_48 = arith.constant 0 : index
    %c0_49 = arith.constant 0 : index
    %111 = vector.load %arg14[%c0_47, %c0_48, %c0_49] : memref<2x8x32xf32, #tpu.memory_space<vmem>>, vector<2x8x32xf32>
    tpu.vector_store %arg14[%c0_47, %c0_48, %c0_49], %110 {strides = array<i32>} : memref<2x8x32xf32, #tpu.memory_space<vmem>>, vector<2x8x32xf32>,
    return
  }
  func.func @transform_0(%arg0: i32) -> (i32, i32, i32) {
    %c0_i32 = arith.constant 0 : i32
    %c0_i32_0 = arith.constant 0 : i32
    %c0_i32_1 = arith.constant 0 : i32
    return %arg0, %c0_i32, %c0_i32_0 : i32, i32, i32
  }
  func.func @transform_1(%arg0: i32) -> (i32, i32) {
    %c0_i32 = arith.constant 0 : i32
    %c0_i32_0 = arith.constant 0 : i32
    %c0_i32_1 = arith.constant 0 : i32
    return %c0_i32, %c0_i32_0 : i32, i32
  }
  func.func @transform_2(%arg0: i32) -> (i32, i32) {
    %c0_i32 = arith.constant 0 : i32
    %c0_i32_0 = arith.constant 0 : i32
    %c0_i32_1 = arith.constant 0 : i32
    return %c0_i32, %c0_i32_0 : i32, i32
  }
  func.func @transform_3(%arg0: i32) -> (i32, i32) {
    %c0_i32 = arith.constant 0 : i32
    %c0_i32_0 = arith.constant 0 : i32
    %c0_i32_1 = arith.constant 0 : i32
    return %c0_i32, %c0_i32_0 : i32, i32
  }
  func.func @transform_4(%arg0: i32) -> (i32, i32) {
    %c0_i32 = arith.constant 0 : i32
    %c0_i32_0 = arith.constant 0 : i32
    %c0_i32_1 = arith.constant 0 : i32
    return %c0_i32, %c0_i32_0 : i32, i32
  }
  func.func @transform_5(%arg0: i32) -> (i32, i32) {
    %c0_i32 = arith.constant 0 : i32
    %c0_i32_0 = arith.constant 0 : i32
    %c0_i32_1 = arith.constant 0 : i32
    return %c0_i32, %c0_i32_0 : i32, i32
  }
  func.func @transform_6(%arg0: i32) -> (i32, i32) {
    %c0_i32 = arith.constant 0 : i32
    %c0_i32_0 = arith.constant 0 : i32
    %c0_i32_1 = arith.constant 0 : i32
    return %c0_i32, %c0_i32_0 : i32, i32
  }
  func.func @transform_7(%arg0: i32) -> (i32, i32) {
    %c0_i32 = arith.constant 0 : i32
    %c0_i32_0 = arith.constant 0 : i32
    %c0_i32_1 = arith.constant 0 : i32
    return %c0_i32, %c0_i32_0 : i32, i32
  }
  func.func @transform_8(%arg0: i32) -> (i32, i32) {
    %c0_i32 = arith.constant 0 : i32
    %c0_i32_0 = arith.constant 0 : i32
    %c0_i32_1 = arith.constant 0 : i32
    return %c0_i32, %c0_i32_0 : i32, i32
  }
  func.func @transform_9(%arg0: i32) -> (i32, i32) {
    %c0_i32 = arith.constant 0 : i32
    %c0_i32_0 = arith.constant 0 : i32
    %c0_i32_1 = arith.constant 0 : i32
    return %c0_i32, %c0_i32_0 : i32, i32
  }
  func.func @transform_10(%arg0: i32) -> (i32, i32) {
    %c0_i32 = arith.constant 0 : i32
    %c0_i32_0 = arith.constant 0 : i32
    %c0_i32_1 = arith.constant 0 : i32
    return %c0_i32, %c0_i32_0 : i32, i32
  }
  func.func @transform_11(%arg0: i32) -> (i32, i32) {
    %c0_i32 = arith.constant 0 : i32
    %c0_i32_0 = arith.constant 0 : i32
    %c0_i32_1 = arith.constant 0 : i32
    return %c0_i32, %c0_i32_0 : i32, i32
  }
  func.func @transform_12(%arg0: i32) -> (i32, i32) {
    %c0_i32 = arith.constant 0 : i32
    %c0_i32_0 = arith.constant 0 : i32
    %c0_i32_1 = arith.constant 0 : i32
    return %c0_i32, %c0_i32_0 : i32, i32
  }
  func.func @transform_13(%arg0: i32) -> (i32, i32, i32) {
    %c0_i32 = arith.constant 0 : i32
    %c0_i32_0 = arith.constant 0 : i32
    %c0_i32_1 = arith.constant 0 : i32
    return %arg0, %c0_i32, %c0_i32_0 : i32, i32, i32
  }
}

</mosaic_0001>

<llo_original>
// kernel: tpu_custom_call.1
$region0: #{tpu_custom_call.1}
  #allocation0 [shape = 'u32[]', space=smem, size = 0x4, offset = 0x4, fixed_abs, tag = 'smem constant byte address 0x4 - core index']
  #allocation1 [shape = 'u32[144,128]{1,0:T(1,128)}', space=vmem, size = 0x12000, scoped, tag = 'internal scratch']
  %s0 = inlined_call_operand.vmem [shape: f32[2,8,32], index: 0, kind: input, shape index: {}]
  %s1 = inlined_call_operand.vmem [shape: f32[1,32], index: 1, kind: input, shape index: {}]
  %s2 = inlined_call_operand.vmem [shape: f32[1,32], index: 2, kind: input, shape index: {}]
  %s3 = inlined_call_operand.vmem [shape: f32[1,32], index: 3, kind: input, shape index: {}]
  %s4 = inlined_call_operand.vmem [shape: f32[1,32], index: 4, kind: input, shape index: {}]
  %s5 = inlined_call_operand.vmem [shape: f32[16,8], index: 5, kind: input, shape index: {}]
  %s6 = inlined_call_operand.vmem [shape: f32[16,1], index: 6, kind: input, shape index: {}]
  %s7 = inlined_call_operand.vmem [shape: f32[8,16], index: 7, kind: input, shape index: {}]
  %s8 = inlined_call_operand.vmem [shape: f32[8,1], index: 8, kind: input, shape index: {}]
  %s9 = inlined_call_operand.vmem [shape: f32[32,64], index: 9, kind: input, shape index: {}]
  %s10 = inlined_call_operand.vmem [shape: f32[1,64], index: 10, kind: input, shape index: {}]
  %s11 = inlined_call_operand.vmem [shape: f32[64,32], index: 11, kind: input, shape index: {}]
  %s12 = inlined_call_operand.vmem [shape: f32[1,32], index: 12, kind: input, shape index: {}]
  %s13 = inlined_call_operand.hbm [shape: f32[2,8,32], index: 13, kind: output, shape index: {}]
  %s14 = sld [smem:[#allocation0]]
  $region62: #{tpu_custom_call.1} parent=0
    _
  %s16 = ssub.s32 1, %s14
  %s17 = scalar_select 0, %s16, %s14
  $region1: #{tpu_custom_call.1} parent=0
    #allocation2 [shape = 'u8[8192]{0}', space=vmem, size = 0x2000, scoped, tag = 'output window, operand 0, single buffered']
    #allocation3 [shape = 's32[1]{0}', space=sflag, size = 0x4, scoped, tag = 'scoped memory for tpu_custom_call.1']
    %18 = vsyncpa [#allocation3], 0
    // Predicated region
    $region2: #{tpu_custom_call.1} parent=1 // pred_check
      _
    $region3: #{tpu_custom_call.1} parent=1 // pred_check_branch
      %20 = sbr.rel (0) target = $region5
    $region4: #{tpu_custom_call.1} parent=1 // pred_region
      _
    $region5: #{tpu_custom_call.1} parent=1 // pred_fallthru
      _
    // Predicated region
    $region6: #{tpu_custom_call.1} parent=1 // pred_check
      _
    $region7: #{tpu_custom_call.1} parent=1 // pred_check_branch
      %22 = sbr.rel (0) target = $region9
    $region8: #{tpu_custom_call.1} parent=1 // pred_region
      _
    $region9: #{tpu_custom_call.1} parent=1 // pred_fallthru
      _
    // Predicated region
    $region10: #{tpu_custom_call.1} parent=1 // pred_check
      _
    $region11: #{tpu_custom_call.1} parent=1 // pred_check_branch
      %24 = sbr.rel (0) target = $region13
    $region12: #{tpu_custom_call.1} parent=1 // pred_region
      _
    $region13: #{tpu_custom_call.1} parent=1 // pred_fallthru
      _
    // Predicated region
    $region14: #{tpu_custom_call.1} parent=1 // pred_check
      _
    $region15: #{tpu_custom_call.1} parent=1 // pred_check_branch
      %26 = sbr.rel (0) target = $region17
    $region16: #{tpu_custom_call.1} parent=1 // pred_region
      _
    $region17: #{tpu_custom_call.1} parent=1 // pred_fallthru
      _
    // Predicated region
    $region18: #{tpu_custom_call.1} parent=1 // pred_check
      _
    $region19: #{tpu_custom_call.1} parent=1 // pred_check_branch
      %28 = sbr.rel (0) target = $region21
    $region20: #{tpu_custom_call.1} parent=1 // pred_region
      _
    $region21: #{tpu_custom_call.1} parent=1 // pred_fallthru
      _
    // Predicated region
    $region22: #{tpu_custom_call.1} parent=1 // pred_check
      _
    $region23: #{tpu_custom_call.1} parent=1 // pred_check_branch
      %30 = sbr.rel (0) target = $region25
    $region24: #{tpu_custom_call.1} parent=1 // pred_region
      _
    $region25: #{tpu_custom_call.1} parent=1 // pred_fallthru
      _
    // Predicated region
    $region26: #{tpu_custom_call.1} parent=1 // pred_check
      _
    $region27: #{tpu_custom_call.1} parent=1 // pred_check_branch
      %32 = sbr.rel (0) target = $region29
    $region28: #{tpu_custom_call.1} parent=1 // pred_region
      _
    $region29: #{tpu_custom_call.1} parent=1 // pred_fallthru
      _
    // Predicated region
    $region30: #{tpu_custom_call.1} parent=1 // pred_check
      _
    $region31: #{tpu_custom_call.1} parent=1 // pred_check_branch
      %34 = sbr.rel (0) target = $region33
    $region32: #{tpu_custom_call.1} parent=1 // pred_region
      _
    $region33: #{tpu_custom_call.1} parent=1 // pred_fallthru
      _
    // Predicated region
    $region34: #{tpu_custom_call.1} parent=1 // pred_check
      _
    $region35: #{tpu_custom_call.1} parent=1 // pred_check_branch
      %36 = sbr.rel (0) target = $region37
    $region36: #{tpu_custom_call.1} parent=1 // pred_region
      _
    $region37: #{tpu_custom_call.1} parent=1 // pred_fallthru
      _
    // Predicated region
    $region38: #{tpu_custom_call.1} parent=1 // pred_check
      _
    $region39: #{tpu_custom_call.1} parent=1 // pred_check_branch
      %38 = sbr.rel (0) target = $region41
    $region40: #{tpu_custom_call.1} parent=1 // pred_region
      _
    $region41: #{tpu_custom_call.1} parent=1 // pred_fallthru
      _
    // Predicated region
    $region42: #{tpu_custom_call.1} parent=1 // pred_check
      _
    $region43: #{tpu_custom_call.1} parent=1 // pred_check_branch
      %40 = sbr.rel (0) target = $region45
    $region44: #{tpu_custom_call.1} parent=1 // pred_region
      _
    $region45: #{tpu_custom_call.1} parent=1 // pred_fallthru
      _
    // Predicated region
    $region46: #{tpu_custom_call.1} parent=1 // pred_check
      _
    $region47: #{tpu_custom_call.1} parent=1 // pred_check_branch
      %42 = sbr.rel (0) target = $region49
    $region48: #{tpu_custom_call.1} parent=1 // pred_region
      _
    $region49: #{tpu_custom_call.1} parent=1 // pred_fallthru
      _
    // Predicated region
    $region50: #{tpu_custom_call.1} parent=1 // pred_check
      _
    $region51: #{tpu_custom_call.1} parent=1 // pred_check_branch
      %44 = sbr.rel (0) target = $region53
    $region52: #{tpu_custom_call.1} parent=1 // pred_region
      _
    $region53: #{tpu_custom_call.1} parent=1 // pred_fallthru
      _
    %v45 = vld [vmem:[%s0] sm:$0xff]
    %v46 = vld [vmem:[%s0 + $0x8] sm:$0xff]
    %v47 = vld [vmem:[%s1] sm:$0x1]
    %v48 = vld [vmem:[%s2] sm:$0x1]
    %vm49 = vcmask 261120
    %v50 = vsel %vm49, %v45, 0.0
    %51 = vadd.xlane.f32.xlu0 %v50
    %v52 = vpop.xlane.xlu0 %51
    %v53 = vsel %vm49, %v46, 0.0
    %54 = vadd.xlane.f32.xlu0 %v53
    %v55 = vpop.xlane.xlu0 %54
    %v56 = vrcp.pop 32.0
    %v57 = vmul.f32 %v52, %v56
    %v58 = vmul.f32 %v55, %v56
    %v59 = vmul.f32 %v45, %v45
    %v60 = vmul.f32 %v46, %v46
    %v61 = vsel %vm49, %v59, 0.0
    %62 = vadd.xlane.f32.xlu0 %v61
    %v63 = vpop.xlane.xlu0 %62
    %v64 = vsel %vm49, %v60, 0.0
    %65 = vadd.xlane.f32.xlu0 %v64
    %v66 = vpop.xlane.xlu0 %65
    %v67 = vmul.f32 %v63, %v56
    %v68 = vmul.f32 %v66, %v56
    %v69 = vmul.f32 %v57, %v57
    %v70 = vmul.f32 %v58, %v58
    %v71 = vsub.f32 %v67, %v69
    %v72 = vsub.f32 %v68, %v70
    %v73 = vmax.f32 %v71, 0.0
    %v74 = vmax.f32 %v72, 0.0
    %v75 = vsub.f32 %v45, %v57
    %v76 = vsub.f32 %v46, %v58
    %v77 = vadd.f32 %v73, 1e-05
    %v78 = vadd.f32 %v74, 1e-05
    %v79 = vrsqrt.pop %v77
    %v80 = vrsqrt.pop %v78
    %v81 = vmul.f32 %v75, %v79
    %v82 = vmul.f32 %v76, %v80
    %v84 = vlaneseq
    %v85 = vshrl.u32 %v84, 7
    %v86 = vsub.s32 0, %v85
    %v87 = vrot.slane %v47, %v86
    %v89 = vmul.f32 %v81, %v87
    %v90 = vmul.f32 %v82, %v87
    %v92 = vlaneseq
    %v93 = vshrl.u32 %v92, 7
    %v94 = vsub.s32 0, %v93
    %v95 = vrot.slane %v48, %v94
    %v97 = vadd.f32 %v89, %v95
    %v98 = vadd.f32 %v90, %v95
    %v99 = vld [vmem:[%s5] sm:$0xff]
    %v100 = vld [vmem:[%s5 + $0x8] sm:$0xff]
    %v101 = vld [vmem:[%s6] sm:$0xff]
    %v102 = vld [vmem:[%s6 + $0x8] sm:$0xff]
    %104 = vset.pattern.permute.xlu0 0
    %105 = vperm.xlu0 %104, %v101
    %v106 = vpop.permute.xlu0 %105
    %109 = vset.pattern.permute.xlu0 0
    %110 = vperm.xlu0 %109, %v102
    %v111 = vpop.permute.xlu0 %110
    %vm113 = vcmask 64512
    %v115 = vsel %vm113, %v99, 0
    %v118 = vsel %vm113, %v100, 0
    %120 = vmatprep.subr.mxu0 0.0
    %121 = vmatpush1.msra.mxu0 %v97
    %122 = vmatprep.subr.mxu0 0.0
    %123 = vmatpush1.msra.mxu0 0.0
    %124 = vmatprep.subr.mxu0 0.0
    %125 = vmatpush1.msra.mxu0 0.0
    %126 = vmatprep.subr.mxu0 0.0
    %127 = vmatpush1.msra.mxu0 0.0
    %128 = vmatprep.subr.mxu0 0.0
    %129 = vmatpush1.msra.mxu0 0.0
    %130 = vmatprep.subr.mxu0 0.0
    %131 = vmatpush1.msra.mxu0 0.0
    %132 = vmatprep.subr.mxu0 0.0
    %133 = vmatpush1.msra.mxu0 0.0
    %134 = vmatprep.subr.mxu0 0.0
    %135 = vmatpush1.msra.mxu0 0.0
    %136 = vmatprep.subr.mxu0 0.0
    %137 = vmatpush1.msra.mxu0 0.0
    %138 = vmatprep.subr.mxu0 0.0
    %139 = vmatpush1.msra.mxu0 0.0
    %140 = vmatprep.subr.mxu0 0.0
    %141 = vmatpush1.msra.mxu0 0.0
    %142 = vmatprep.subr.mxu0 0.0
    %143 = vmatpush1.msra.mxu0 0.0
    %144 = vmatprep.subr.mxu0 0.0
    %145 = vmatpush1.msra.mxu0 0.0
    %146 = vmatprep.subr.mxu0 0.0
    %147 = vmatpush1.msra.mxu0 0.0
    %148 = vmatprep.subr.mxu0 0.0
    %149 = vmatpush1.msra.mxu0 0.0
    %150 = vmatprep.subr.mxu0 0.0
    %151 = vmatpush1.msra.mxu0 0.0
    %152 = vmatprep.subr.mxu0 0.0
    %153 = vmatpush1.msra.mxu0 0.0
    %154 = vmatprep.subr.mxu0 0.0
    %155 = vmatpush1.msra.mxu0 0.0
    %156 = vmatprep.subr.mxu0 0.0
    %157 = vmatpush1.msra.mxu0 0.0
    %158 = vmatprep.subr.mxu0 0.0
    %159 = vmatpush1.msra.mxu0 0.0
    %160 = vmatprep.subr.mxu0 0.0
    %161 = vmatpush1.msra.mxu0 0.0
    %162 = vmatprep.subr.mxu0 0.0
    %163 = vmatpush1.msra.mxu0 0.0
    %164 = vmatprep.subr.mxu0 0.0
    %165 = vmatpush1.msra.mxu0 0.0
    %166 = vmatprep.subr.mxu0 0.0
    %167 = vmatpush1.msra.mxu0 0.0
    %168 = vmatprep.subr.mxu0 0.0
    %169 = vmatpush1.msra.mxu0 0.0
    %170 = vmatprep.subr.mxu0 0.0
    %171 = vmatpush1.msra.mxu0 0.0
    %172 = vmatprep.subr.mxu0 0.0
    %173 = vmatpush1.msra.mxu0 0.0
    %174 = vmatprep.subr.mxu0 0.0
    %175 = vmatpush1.msra.mxu0 0.0
    %176 = vmatprep.subr.mxu0 0.0
    %177 = vmatpush1.msra.mxu0 0.0
    %178 = vmatprep.subr.mxu0 0.0
    %179 = vmatpush1.msra.mxu0 0.0
    %180 = vmatprep.subr.mxu0 0.0
    %181 = vmatpush1.msra.mxu0 0.0
    %182 = vmatprep.subr.mxu0 0.0
    %183 = vmatpush1.msra.mxu0 0.0
    %184 = vmatprep.mubr.f32.mxu0 0.0
    %185 = vmatmul.mubr.f32.gmra.mrb[0].mxu0 %v115
    %v186 = vpop.f32.mrb[0].mxu0
    %v187 = vadd.f32 %v106, %v186
    %v188 = vpop.f32.mrb[0].mxu0
    %189 = vmatprep.mubr.f32.mxu0 0.0
    %190 = vmatmul.mubr.f32.gmra.mrb[0].mxu0 %v118
    %v191 = vpop.f32.mrb[0].mxu0
    %v192 = vadd.f32 %v111, %v191
    %v193 = vpop.f32.mrb[0].mxu0
    %194 = vdwg.mxu0
    %195 = vmatprep.subr.mxu0 0.0
    %196 = vmatpush1.msra.mxu0 %v98
    %197 = vmatprep.subr.mxu0 0.0
    %198 = vmatpush1.msra.mxu0 0.0
    %199 = vmatprep.subr.mxu0 0.0
    %200 = vmatpush1.msra.mxu0 0.0
    %201 = vmatprep.subr.mxu0 0.0
    %202 = vmatpush1.msra.mxu0 0.0
    %203 = vmatprep.subr.mxu0 0.0
    %204 = vmatpush1.msra.mxu0 0.0
    %205 = vmatprep.subr.mxu0 0.0
    %206 = vmatpush1.msra.mxu0 0.0
    %207 = vmatprep.subr.mxu0 0.0
    %208 = vmatpush1.msra.mxu0 0.0
    %209 = vmatprep.subr.mxu0 0.0
    %210 = vmatpush1.msra.mxu0 0.0
    %211 = vmatprep.subr.mxu0 0.0
    %212 = vmatpush1.msra.mxu0 0.0
    %213 = vmatprep.subr.mxu0 0.0
    %214 = vmatpush1.msra.mxu0 0.0
    %215 = vmatprep.subr.mxu0 0.0
    %216 = vmatpush1.msra.mxu0 0.0
    %217 = vmatprep.subr.mxu0 0.0
    %218 = vmatpush1.msra.mxu0 0.0
    %219 = vmatprep.subr.mxu0 0.0
    %220 = vmatpush1.msra.mxu0 0.0
    %221 = vmatprep.subr.mxu0 0.0
    %222 = vmatpush1.msra.mxu0 0.0
    %223 = vmatprep.subr.mxu0 0.0
    %224 = vmatpush1.msra.mxu0 0.0
    %225 = vmatprep.subr.mxu0 0.0
    %226 = vmatpush1.msra.mxu0 0.0
    %227 = vmatprep.subr.mxu0 0.0
    %228 = vmatpush1.msra.mxu0 0.0
    %229 = vmatprep.subr.mxu0 0.0
    %230 = vmatpush1.msra.mxu0 0.0
    %231 = vmatprep.subr.mxu0 0.0
    %232 = vmatpush1.msra.mxu0 0.0
    %233 = vmatprep.subr.mxu0 0.0
    %234 = vmatpush1.msra.mxu0 0.0
    %235 = vmatprep.subr.mxu0 0.0
    %236 = vmatpush1.msra.mxu0 0.0
    %237 = vmatprep.subr.mxu0 0.0
    %238 = vmatpush1.msra.mxu0 0.0
    %239 = vmatprep.subr.mxu0 0.0
    %240 = vmatpush1.msra.mxu0 0.0
    %241 = vmatprep.subr.mxu0 0.0
    %242 = vmatpush1.msra.mxu0 0.0
    %243 = vmatprep.subr.mxu0 0.0
    %244 = vmatpush1.msra.mxu0 0.0
    %245 = vmatprep.subr.mxu0 0.0
    %246 = vmatpush1.msra.mxu0 0.0
    %247 = vmatprep.subr.mxu0 0.0
    %248 = vmatpush1.msra.mxu0 0.0
    %249 = vmatprep.subr.mxu0 0.0
    %250 = vmatpush1.msra.mxu0 0.0
    %251 = vmatprep.subr.mxu0 0.0
    %252 = vmatpush1.msra.mxu0 0.0
    %253 = vmatprep.subr.mxu0 0.0
    %254 = vmatpush1.msra.mxu0 0.0
    %255 = vmatprep.subr.mxu0 0.0
    %256 = vmatpush1.msra.mxu0 0.0
    %257 = vmatprep.subr.mxu0 0.0
    %258 = vmatpush1.msra.mxu0 0.0
    %259 = vmatprep.mubr.f32.mxu0 0.0
    %260 = vmatmul.mubr.f32.gmra.mrb[0].mxu0 %v115
    %v261 = vpop.f32.mrb[0].mxu0
    %v262 = vadd.f32 %v106, %v261
    %v263 = vpop.f32.mrb[0].mxu0
    %264 = vmatprep.mubr.f32.mxu0 0.0
    %265 = vmatmul.mubr.f32.gmra.mrb[0].mxu0 %v118
    %v266 = vpop.f32.mrb[0].mxu0
    %v267 = vadd.f32 %v111, %v266
    %v268 = vpop.f32.mrb[0].mxu0
    %269 = vdwg.mxu0
    %v270 = vmul.f32 %v187, 0.5
    %v271 = vmul.f32 %v192, 0.5
    %v272 = vmul.f32 %v262, 0.5
    %v273 = vmul.f32 %v267, 0.5
    %v274 = vrcp.pop 1.4142135
    %v275 = vmul.f32 %v187, %v274
    %v276 = vmul.f32 %v192, %v274
    %v277 = vmul.f32 %v262, %v274
    %v278 = vmul.f32 %v267, %v274
    %v279 = verf.f32.pop %v275
    %v280 = verf.f32.pop %v276
    %v281 = verf.f32.pop %v277
    %v282 = verf.f32.pop %v278
    %v283 = vadd.f32 %v279, 1.0
    %v284 = vadd.f32 %v280, 1.0
    %v285 = vadd.f32 %v281, 1.0
    %v286 = vadd.f32 %v282, 1.0
    %v287 = vmul.f32 %v270, %v283
    %v288 = vmul.f32 %v271, %v284
    %v289 = vmul.f32 %v272, %v285
    %v290 = vmul.f32 %v273, %v286
    %v291 = vld [vmem:[%s7] sm:$0xff]
    %vm292 = vcmask 130048
    %v294 = vsel %vm292, %v291, 0
    %296 = vmatprep.subr.mxu0 0.0
    %297 = vmatpush1.msra.mxu0 %v287
    %298 = vmatprep.subr.mxu0 0.0
    %299 = vmatpush1.msra.mxu0 %v288
    %300 = vmatprep.subr.mxu0 0.0
    %301 = vmatpush1.msra.mxu0 0.0
    %302 = vmatprep.subr.mxu0 0.0
    %303 = vmatpush1.msra.mxu0 0.0
    %304 = vmatprep.subr.mxu0 0.0
    %305 = vmatpush1.msra.mxu0 0.0
    %306 = vmatprep.subr.mxu0 0.0
    %307 = vmatpush1.msra.mxu0 0.0
    %308 = vmatprep.subr.mxu0 0.0
    %309 = vmatpush1.msra.mxu0 0.0
    %310 = vmatprep.subr.mxu0 0.0
    %311 = vmatpush1.msra.mxu0 0.0
    %312 = vmatprep.subr.mxu0 0.0
    %313 = vmatpush1.msra.mxu0 0.0
    %314 = vmatprep.subr.mxu0 0.0
    %315 = vmatpush1.msra.mxu0 0.0
    %316 = vmatprep.subr.mxu0 0.0
    %317 = vmatpush1.msra.mxu0 0.0
    %318 = vmatprep.subr.mxu0 0.0
    %319 = vmatpush1.msra.mxu0 0.0
    %320 = vmatprep.subr.mxu0 0.0
    %321 = vmatpush1.msra.mxu0 0.0
    %322 = vmatprep.subr.mxu0 0.0
    %323 = vmatpush1.msra.mxu0 0.0
    %324 = vmatprep.subr.mxu0 0.0
    %325 = vmatpush1.msra.mxu0 0.0
    %326 = vmatprep.subr.mxu0 0.0
    %327 = vmatpush1.msra.mxu0 0.0
    %328 = vmatprep.subr.mxu0 0.0
    %329 = vmatpush1.msra.mxu0 0.0
    %330 = vmatprep.subr.mxu0 0.0
    %331 = vmatpush1.msra.mxu0 0.0
    %332 = vmatprep.subr.mxu0 0.0
    %333 = vmatpush1.msra.mxu0 0.0
    %334 = vmatprep.subr.mxu0 0.0
    %335 = vmatpush1.msra.mxu0 0.0
    %336 = vmatprep.subr.mxu0 0.0
    %337 = vmatpush1.msra.mxu0 0.0
    %338 = vmatprep.subr.mxu0 0.0
    %339 = vmatpush1.msra.mxu0 0.0
    %340 = vmatprep.subr.mxu0 0.0
    %341 = vmatpush1.msra.mxu0 0.0
    %342 = vmatprep.subr.mxu0 0.0
    %343 = vmatpush1.msra.mxu0 0.0
    %344 = vmatprep.subr.mxu0 0.0
    %345 = vmatpush1.msra.mxu0 0.0
    %346 = vmatprep.subr.mxu0 0.0
    %347 = vmatpush1.msra.mxu0 0.0
    %348 = vmatprep.subr.mxu0 0.0
    %349 = vmatpush1.msra.mxu0 0.0
    %350 = vmatprep.subr.mxu0 0.0
    %351 = vmatpush1.msra.mxu0 0.0
    %352 = vmatprep.subr.mxu0 0.0
    %353 = vmatpush1.msra.mxu0 0.0
    %354 = vmatprep.subr.mxu0 0.0
    %355 = vmatpush1.msra.mxu0 0.0
    %356 = vmatprep.subr.mxu0 0.0
    %357 = vmatpush1.msra.mxu0 0.0
    %358 = vmatprep.subr.mxu0 0.0
    %359 = vmatpush1.msra.mxu0 0.0
    %360 = vmatprep.mubr.f32.mxu0 0.0
    %361 = vmatmul.mubr.f32.gmra.mrb[0].mxu0 %v294
    %v362 = vpop.f32.mrb[0].mxu0
    %v363 = vadd.f32 0.0, %v362
    %v364 = vpop.f32.mrb[0].mxu0
    %365 = vdwg.mxu0
    %366 = vmatprep.subr.mxu0 0.0
    %367 = vmatpush1.msra.mxu0 %v289
    %368 = vmatprep.subr.mxu0 0.0
    %369 = vmatpush1.msra.mxu0 %v290
    %370 = vmatprep.subr.mxu0 0.0
    %371 = vmatpush1.msra.mxu0 0.0
    %372 = vmatprep.subr.mxu0 0.0
    %373 = vmatpush1.msra.mxu0 0.0
    %374 = vmatprep.subr.mxu0 0.0
    %375 = vmatpush1.msra.mxu0 0.0
    %376 = vmatprep.subr.mxu0 0.0
    %377 = vmatpush1.msra.mxu0 0.0
    %378 = vmatprep.subr.mxu0 0.0
    %379 = vmatpush1.msra.mxu0 0.0
    %380 = vmatprep.subr.mxu0 0.0
    %381 = vmatpush1.msra.mxu0 0.0
    %382 = vmatprep.subr.mxu0 0.0
    %383 = vmatpush1.msra.mxu0 0.0
    %384 = vmatprep.subr.mxu0 0.0
    %385 = vmatpush1.msra.mxu0 0.0
    %386 = vmatprep.subr.mxu0 0.0
    %387 = vmatpush1.msra.mxu0 0.0
    %388 = vmatprep.subr.mxu0 0.0
    %389 = vmatpush1.msra.mxu0 0.0
    %390 = vmatprep.subr.mxu0 0.0
    %391 = vmatpush1.msra.mxu0 0.0
    %392 = vmatprep.subr.mxu0 0.0
    %393 = vmatpush1.msra.mxu0 0.0
    %394 = vmatprep.subr.mxu0 0.0
    %395 = vmatpush1.msra.mxu0 0.0
    %396 = vmatprep.subr.mxu0 0.0
    %397 = vmatpush1.msra.mxu0 0.0
    %398 = vmatprep.subr.mxu0 0.0
    %399 = vmatpush1.msra.mxu0 0.0
    %400 = vmatprep.subr.mxu0 0.0
    %401 = vmatpush1.msra.mxu0 0.0
    %402 = vmatprep.subr.mxu0 0.0
    %403 = vmatpush1.msra.mxu0 0.0
    %404 = vmatprep.subr.mxu0 0.0
    %405 = vmatpush1.msra.mxu0 0.0
    %406 = vmatprep.subr.mxu0 0.0
    %407 = vmatpush1.msra.mxu0 0.0
    %408 = vmatprep.subr.mxu0 0.0
    %409 = vmatpush1.msra.mxu0 0.0
    %410 = vmatprep.subr.mxu0 0.0
    %411 = vmatpush1.msra.mxu0 0.0
    %412 = vmatprep.subr.mxu0 0.0
    %413 = vmatpush1.msra.mxu0 0.0
    %414 = vmatprep.subr.mxu0 0.0
    %415 = vmatpush1.msra.mxu0 0.0
    %416 = vmatprep.subr.mxu0 0.0
    %417 = vmatpush1.msra.mxu0 0.0
    %418 = vmatprep.subr.mxu0 0.0
    %419 = vmatpush1.msra.mxu0 0.0
    %420 = vmatprep.subr.mxu0 0.0
    %421 = vmatpush1.msra.mxu0 0.0
    %422 = vmatprep.subr.mxu0 0.0
    %423 = vmatpush1.msra.mxu0 0.0
    %424 = vmatprep.subr.mxu0 0.0
    %425 = vmatpush1.msra.mxu0 0.0
    %426 = vmatprep.subr.mxu0 0.0
    %427 = vmatpush1.msra.mxu0 0.0
    %428 = vmatprep.subr.mxu0 0.0
    %429 = vmatpush1.msra.mxu0 0.0
    %430 = vmatprep.mubr.f32.mxu0 0.0
    %431 = vmatmul.mubr.f32.gmra.mrb[0].mxu0 %v294
    %v432 = vpop.f32.mrb[0].mxu0
    %v433 = vadd.f32 0.0, %v432
    %v434 = vpop.f32.mrb[0].mxu0
    %435 = vdwg.mxu0
    %v436 = vadd.f32 %v45, %v363
    %v437 = vadd.f32 %v46, %v433
    %v438 = vld [vmem:[%s8] sm:$0xff]
    %440 = vset.pattern.permute.xlu0 0
    %441 = vperm.xlu0 %440, %v438
    %v442 = vpop.permute.xlu0 %441
    %v444 = vadd.f32 %v436, %v442
    %v445 = vadd.f32 %v437, %v442
    %v446 = vld [vmem:[%s3] sm:$0x1]
    %v447 = vld [vmem:[%s4] sm:$0x1]
    %v448 = vsel %vm49, %v444, 0.0
    %449 = vadd.xlane.f32.xlu0 %v448
    %v450 = vpop.xlane.xlu0 %449
    %v451 = vsel %vm49, %v445, 0.0
    %452 = vadd.xlane.f32.xlu0 %v451
    %v453 = vpop.xlane.xlu0 %452
    %v454 = vmul.f32 %v450, %v56
    %v455 = vmul.f32 %v453, %v56
    %v456 = vmul.f32 %v444, %v444
    %v457 = vmul.f32 %v445, %v445
    %v458 = vsel %vm49, %v456, 0.0
    %459 = vadd.xlane.f32.xlu0 %v458
    %v460 = vpop.xlane.xlu0 %459
    %v461 = vsel %vm49, %v457, 0.0
    %462 = vadd.xlane.f32.xlu0 %v461
    %v463 = vpop.xlane.xlu0 %462
    %v464 = vmul.f32 %v460, %v56
    %v465 = vmul.f32 %v463, %v56
    %v466 = vmul.f32 %v454, %v454
    %v467 = vmul.f32 %v455, %v455
    %v468 = vsub.f32 %v464, %v466
    %v469 = vsub.f32 %v465, %v467
    %v470 = vmax.f32 %v468, 0.0
    %v471 = vmax.f32 %v469, 0.0
    %v472 = vsub.f32 %v444, %v454
    %v473 = vsub.f32 %v445, %v455
    %v474 = vadd.f32 %v470, 1e-05
    %v475 = vadd.f32 %v471, 1e-05
    %v476 = vrsqrt.pop %v474
    %v477 = vrsqrt.pop %v475
    %v478 = vmul.f32 %v472, %v476
    %v479 = vmul.f32 %v473, %v477
    %v481 = vlaneseq
    %v482 = vshrl.u32 %v481, 7
    %v483 = vsub.s32 0, %v482
    %v484 = vrot.slane %v446, %v483
    %v486 = vmul.f32 %v478, %v484
    %v487 = vmul.f32 %v479, %v484
    %v489 = vlaneseq
    %v490 = vshrl.u32 %v489, 7
    %v491 = vsub.s32 0, %v490
    %v492 = vrot.slane %v447, %v491
    %v494 = vadd.f32 %v486, %v492
    %v495 = vadd.f32 %v487, %v492
    %v496 = vld [vmem:[%s9] sm:$0xff]
    %v497 = vld [vmem:[%s9 + $0x8] sm:$0xff]
    %v498 = vld [vmem:[%s9 + $0x10] sm:$0xff]
    %v499 = vld [vmem:[%s9 + $0x18] sm:$0xff]
    %v500 = vld [vmem:[%s10] sm:$0x1]
    %v502 = vlaneseq
    %v503 = vshrl.u32 %v502, 7
    %v504 = vsub.s32 0, %v503
    %v505 = vrot.slane %v500, %v504
    %v508 = vsel %vm49, %v494, 0
    %v511 = vsel %vm49, %v495, 0
    %513 = vmatprep.subr.mxu0 0.0
    %514 = vmatpush1.msra.mxu0 %v496
    %515 = vmatprep.subr.mxu0 0.0
    %516 = vmatpush1.msra.mxu0 %v497
    %517 = vmatprep.subr.mxu0 0.0
    %518 = vmatpush1.msra.mxu0 %v498
    %519 = vmatprep.subr.mxu0 0.0
    %520 = vmatpush1.msra.mxu0 %v499
    %521 = vmatprep.subr.mxu0 0.0
    %522 = vmatpush1.msra.mxu0 0.0
    %523 = vmatprep.subr.mxu0 0.0
    %524 = vmatpush1.msra.mxu0 0.0
    %525 = vmatprep.subr.mxu0 0.0
    %526 = vmatpush1.msra.mxu0 0.0
    %527 = vmatprep.subr.mxu0 0.0
    %528 = vmatpush1.msra.mxu0 0.0
    %529 = vmatprep.subr.mxu0 0.0
    %530 = vmatpush1.msra.mxu0 0.0
    %531 = vmatprep.subr.mxu0 0.0
    %532 = vmatpush1.msra.mxu0 0.0
    %533 = vmatprep.subr.mxu0 0.0
    %534 = vmatpush1.msra.mxu0 0.0
    %535 = vmatprep.subr.mxu0 0.0
    %536 = vmatpush1.msra.mxu0 0.0
    %537 = vmatprep.subr.mxu0 0.0
    %538 = vmatpush1.msra.mxu0 0.0
    %539 = vmatprep.subr.mxu0 0.0
    %540 = vmatpush1.msra.mxu0 0.0
    %541 = vmatprep.subr.mxu0 0.0
    %542 = vmatpush1.msra.mxu0 0.0
    %543 = vmatprep.subr.mxu0 0.0
    %544 = vmatpush1.msra.mxu0 0.0
    %545 = vmatprep.subr.mxu0 0.0
    %546 = vmatpush1.msra.mxu0 0.0
    %547 = vmatprep.subr.mxu0 0.0
    %548 = vmatpush1.msra.mxu0 0.0
    %549 = vmatprep.subr.mxu0 0.0
    %550 = vmatpush1.msra.mxu0 0.0
    %551 = vmatprep.subr.mxu0 0.0
    %552 = vmatpush1.msra.mxu0 0.0
    %553 = vmatprep.subr.mxu0 0.0
    %554 = vmatpush1.msra.mxu0 0.0
    %555 = vmatprep.subr.mxu0 0.0
    %556 = vmatpush1.msra.mxu0 0.0
    %557 = vmatprep.subr.mxu0 0.0
    %558 = vmatpush1.msra.mxu0 0.0
    %559 = vmatprep.subr.mxu0 0.0
    %560 = vmatpush1.msra.mxu0 0.0
    %561 = vmatprep.subr.mxu0 0.0
    %562 = vmatpush1.msra.mxu0 0.0
    %563 = vmatprep.subr.mxu0 0.0
    %564 = vmatpush1.msra.mxu0 0.0
    %565 = vmatprep.subr.mxu0 0.0
    %566 = vmatpush1.msra.mxu0 0.0
    %567 = vmatprep.subr.mxu0 0.0
    %568 = vmatpush1.msra.mxu0 0.0
    %569 = vmatprep.subr.mxu0 0.0
    %570 = vmatpush1.msra.mxu0 0.0
    %571 = vmatprep.subr.mxu0 0.0
    %572 = vmatpush1.msra.mxu0 0.0
    %573 = vmatprep.subr.mxu0 0.0
    %574 = vmatpush1.msra.mxu0 0.0
    %575 = vmatprep.subr.mxu0 0.0
    %576 = vmatpush1.msra.mxu0 0.0
    %577 = vmatprep.mubr.f32.mxu0 0.0
    %578 = vmatmul.mubr.f32.gmra.mrb[0].mxu0 %v508
    %v579 = vpop.f32.mrb[0].mxu0
    %v580 = vadd.f32 %v505, %v579
    %v581 = vpop.f32.mrb[0].mxu0
    %582 = vmatprep.mubr.f32.mxu0 0.0
    %583 = vmatmul.mubr.f32.gmra.mrb[0].mxu0 %v511
    %v584 = vpop.f32.mrb[0].mxu0
    %v585 = vadd.f32 %v505, %v584
    %v586 = vpop.f32.mrb[0].mxu0
    %587 = vdwg.mxu0
    %v588 = vmul.f32 %v580, 0.5
    %v589 = vmul.f32 %v585, 0.5
    %v590 = vmul.f32 %v580, %v274
    %v591 = vmul.f32 %v585, %v274
    %v592 = verf.f32.pop %v590
    %v593 = verf.f32.pop %v591
    %v594 = vadd.f32 %v592, 1.0
    %v595 = vadd.f32 %v593, 1.0
    %v596 = vmul.f32 %v588, %v594
    %v597 = vmul.f32 %v589, %v595
    %v598 = vld [vmem:[%s11] sm:$0xff]
    %v599 = vld [vmem:[%s11 + $0x8] sm:$0xff]
    %v600 = vld [vmem:[%s11 + $0x10] sm:$0xff]
    %v601 = vld [vmem:[%s11 + $0x18] sm:$0xff]
    %v602 = vld [vmem:[%s11 + $0x20] sm:$0xff]
    %v603 = vld [vmem:[%s11 + $0x28] sm:$0xff]
    %v604 = vld [vmem:[%s11 + $0x30] sm:$0xff]
    %v605 = vld [vmem:[%s11 + $0x38] sm:$0xff]
    %v606 = vld [vmem:[%s12] sm:$0x1]
    %v608 = vlaneseq
    %v609 = vshrl.u32 %v608, 7
    %v610 = vsub.s32 0, %v609
    %v611 = vrot.slane %v606, %v610
    %vm613 = vcmask 523264
    %v615 = vsel %vm613, %v596, 0
    %v618 = vsel %vm613, %v597, 0
    %620 = vmatprep.subr.mxu0 0.0
    %621 = vmatpush1.msra.mxu0 %v598
    %622 = vmatprep.subr.mxu0 0.0
    %623 = vmatpush1.msra.mxu0 %v599
    %624 = vmatprep.subr.mxu0 0.0
    %625 = vmatpush1.msra.mxu0 %v600
    %626 = vmatprep.subr.mxu0 0.0
    %627 = vmatpush1.msra.mxu0 %v601
    %628 = vmatprep.subr.mxu0 0.0
    %629 = vmatpush1.msra.mxu0 %v602
    %630 = vmatprep.subr.mxu0 0.0
    %631 = vmatpush1.msra.mxu0 %v603
    %632 = vmatprep.subr.mxu0 0.0
    %633 = vmatpush1.msra.mxu0 %v604
    %634 = vmatprep.subr.mxu0 0.0
    %635 = vmatpush1.msra.mxu0 %v605
    %636 = vmatprep.subr.mxu0 0.0
    %637 = vmatpush1.msra.mxu0 0.0
    %638 = vmatprep.subr.mxu0 0.0
    %639 = vmatpush1.msra.mxu0 0.0
    %640 = vmatprep.subr.mxu0 0.0
    %641 = vmatpush1.msra.mxu0 0.0
    %642 = vmatprep.subr.mxu0 0.0
    %643 = vmatpush1.msra.mxu0 0.0
    %644 = vmatprep.subr.mxu0 0.0
    %645 = vmatpush1.msra.mxu0 0.0
    %646 = vmatprep.subr.mxu0 0.0
    %647 = vmatpush1.msra.mxu0 0.0
    %648 = vmatprep.subr.mxu0 0.0
    %649 = vmatpush1.msra.mxu0 0.0
    %650 = vmatprep.subr.mxu0 0.0
    %651 = vmatpush1.msra.mxu0 0.0
    %652 = vmatprep.subr.mxu0 0.0
    %653 = vmatpush1.msra.mxu0 0.0
    %654 = vmatprep.subr.mxu0 0.0
    %655 = vmatpush1.msra.mxu0 0.0
    %656 = vmatprep.subr.mxu0 0.0
    %657 = vmatpush1.msra.mxu0 0.0
    %658 = vmatprep.subr.mxu0 0.0
    %659 = vmatpush1.msra.mxu0 0.0
    %660 = vmatprep.subr.mxu0 0.0
    %661 = vmatpush1.msra.mxu0 0.0
    %662 = vmatprep.subr.mxu0 0.0
    %663 = vmatpush1.msra.mxu0 0.0
    %664 = vmatprep.subr.mxu0 0.0
    %665 = vmatpush1.msra.mxu0 0.0
    %666 = vmatprep.subr.mxu0 0.0
    %667 = vmatpush1.msra.mxu0 0.0
    %668 = vmatprep.subr.mxu0 0.0
    %669 = vmatpush1.msra.mxu0 0.0
    %670 = vmatprep.subr.mxu0 0.0
    %671 = vmatpush1.msra.mxu0 0.0
    %672 = vmatprep.subr.mxu0 0.0
    %673 = vmatpush1.msra.mxu0 0.0
    %674 = vmatprep.subr.mxu0 0.0
    %675 = vmatpush1.msra.mxu0 0.0
    %676 = vmatprep.subr.mxu0 0.0
    %677 = vmatpush1.msra.mxu0 0.0
    %678 = vmatprep.subr.mxu0 0.0
    %679 = vmatpush1.msra.mxu0 0.0
    %680 = vmatprep.subr.mxu0 0.0
    %681 = vmatpush1.msra.mxu0 0.0
    %682 = vmatprep.subr.mxu0 0.0
    %683 = vmatpush1.msra.mxu0 0.0
    %684 = vmatprep.mubr.f32.mxu0 0.0
    %685 = vmatmul.mubr.f32.gmra.mrb[0].mxu0 %v615
    %v686 = vpop.f32.mrb[0].mxu0
    %v687 = vadd.f32 %v611, %v686
    %v688 = vpop.f32.mrb[0].mxu0
    %689 = vmatprep.mubr.f32.mxu0 0.0
    %690 = vmatmul.mubr.f32.gmra.mrb[0].mxu0 %v618
    %v691 = vpop.f32.mrb[0].mxu0
    %v692 = vadd.f32 %v611, %v691
    %v693 = vpop.f32.mrb[0].mxu0
    %694 = vdwg.mxu0
    %v695 = vadd.f32 %v444, %v687
    %v696 = vadd.f32 %v445, %v692
    %697 = vst.msk [vmem:[#allocation2] sm:$0xff] %vm49, %v695
    %698 = vst.msk [vmem:[#allocation2 + $0x8] sm:$0xff] %vm49, %v696
    // Predicated region
    $region54: #{tpu_custom_call.1} parent=1 // pred_check
      _
    $region55: #{tpu_custom_call.1} parent=1 // pred_check_branch
      %700 = sbr.rel (0) target = $region57
    $region56: #{tpu_custom_call.1} parent=1 // pred_region
      %s702 = ssub.s32 256, 256
      %703 = vsyncadd [#allocation3], %s702
      %s704 = sshll.u32 [#allocation2], 4
      %s705 = int_to_ptr.vmem [resolvable:$true] %s704
      %710 = dma.vmem_to_hbm [thread:$0]  %s705, 256, %s13, [#allocation3], 128, 128, 8
    $region57: #{tpu_custom_call.1} parent=1 // pred_fallthru
      _
    // Predicated region
    $region58: #{tpu_custom_call.1} parent=1 // pred_check
      _
    $region59: #{tpu_custom_call.1} parent=1 // pred_check_branch
      %712 = sbr.rel (0) target = $region61
    $region60: #{tpu_custom_call.1} parent=1 // pred_region
      %713 = dma.done [#allocation3], 256
    $region61: #{tpu_custom_call.1} parent=1 // pred_fallthru
      _
    %714 = vsyncpa [#allocation3], 1

// kernel: tpu_custom_call.1
$region0: #{tpu_custom_call.1}
  #allocation0 [shape = 'u32[]', space=smem, size = 0x4, offset = 0x4, fixed_abs, tag = 'smem constant byte address 0x4 - core index']
  #allocation1 [shape = 'u32[144,128]{1,0:T(1,128)}', space=vmem, size = 0x12000, scoped, tag = 'internal scratch']
  %s0 = inlined_call_operand.vmem [shape: f32[2,8,32], index: 0, kind: input, shape index: {}]
  %s1 = inlined_call_operand.vmem [shape: f32[1,32], index: 1, kind: input, shape index: {}]
  %s2 = inlined_call_operand.vmem [shape: f32[1,32], index: 2, kind: input, shape index: {}]
  %s3 = inlined_call_operand.vmem [shape: f32[1,32], index: 3, kind: input, shape index: {}]
  %s4 = inlined_call_operand.vmem [shape: f32[1,32], index: 4, kind: input, shape index: {}]
  %s5 = inlined_call_operand.vmem [shape: f32[16,8], index: 5, kind: input, shape index: {}]
  %s6 = inlined_call_operand.vmem [shape: f32[16,1], index: 6, kind: input, shape index: {}]
  %s7 = inlined_call_operand.vmem [shape: f32[8,16], index: 7, kind: input, shape index: {}]
  %s8 = inlined_call_operand.vmem [shape: f32[8,1], index: 8, kind: input, shape index: {}]
  %s9 = inlined_call_operand.vmem [shape: f32[32,64], index: 9, kind: input, shape index: {}]
  %s10 = inlined_call_operand.vmem [shape: f32[1,64], index: 10, kind: input, shape index: {}]
  %s11 = inlined_call_operand.vmem [shape: f32[64,32], index: 11, kind: input, shape index: {}]
  %s12 = inlined_call_operand.vmem [shape: f32[1,32], index: 12, kind: input, shape index: {}]
  %s13 = inlined_call_operand.hbm [shape: f32[2,8,32], index: 13, kind: output, shape index: {}]
  %s14 = sld [smem:[#allocation0]]
  $region62: #{tpu_custom_call.1} parent=0
    _
  %s16 = ssub.s32 1, %s14
  %s17 = scalar_select 0, %s16, %s14
  $region1: #{tpu_custom_call.1} parent=0
    #allocation2 [shape = 'u8[8192]{0}', space=vmem, size = 0x2000, scoped, tag = 'output window, operand 0, single buffered']
    #allocation3 [shape = 's32[1]{0}', space=sflag, size = 0x4, scoped, tag = 'scoped memory for tpu_custom_call.1']
    %18 = vsyncpa [#allocation3], 0
    // Predicated region
    $region2: #{tpu_custom_call.1} parent=1 // pred_check
      _
    $region3: #{tpu_custom_call.1} parent=1 // pred_check_branch
      %20 = sbr.rel (0) target = $region5
    $region4: #{tpu_custom_call.1} parent=1 // pred_region
      _
    $region5: #{tpu_custom_call.1} parent=1 // pred_fallthru
      _
    // Predicated region
    $region6: #{tpu_custom_call.1} parent=1 // pred_check
      _
    $region7: #{tpu_custom_call.1} parent=1 // pred_check_branch
      %22 = sbr.rel (0) target = $region9
    $region8: #{tpu_custom_call.1} parent=1 // pred_region
      _
    $region9: #{tpu_custom_call.1} parent=1 // pred_fallthru
      _
    // Predicated region
    $region10: #{tpu_custom_call.1} parent=1 // pred_check
      _
    $region11: #{tpu_custom_call.1} parent=1 // pred_check_branch
      %24 = sbr.rel (0) target = $region13
    $region12: #{tpu_custom_call.1} parent=1 // pred_region
      _
    $region13: #{tpu_custom_call.1} parent=1 // pred_fallthru
      _
    // Predicated region
    $region14: #{tpu_custom_call.1} parent=1 // pred_check
      _
    $region15: #{tpu_custom_call.1} parent=1 // pred_check_branch
      %26 = sbr.rel (0) target = $region17
    $region16: #{tpu_custom_call.1} parent=1 // pred_region
      _
    $region17: #{tpu_custom_call.1} parent=1 // pred_fallthru
      _
    // Predicated region
    $region18: #{tpu_custom_call.1} parent=1 // pred_check
      _
    $region19: #{tpu_custom_call.1} parent=1 // pred_check_branch
      %28 = sbr.rel (0) target = $region21
    $region20: #{tpu_custom_call.1} parent=1 // pred_region
      _
    $region21: #{tpu_custom_call.1} parent=1 // pred_fallthru
      _
    // Predicated region
    $region22: #{tpu_custom_call.1} parent=1 // pred_check
      _
    $region23: #{tpu_custom_call.1} parent=1 // pred_check_branch
      %30 = sbr.rel (0) target = $region25
    $region24: #{tpu_custom_call.1} parent=1 // pred_region
      _
    $region25: #{tpu_custom_call.1} parent=1 // pred_fallthru
      _
    // Predicated region
    $region26: #{tpu_custom_call.1} parent=1 // pred_check
      _
    $region27: #{tpu_custom_call.1} parent=1 // pred_check_branch
      %32 = sbr.rel (0) target = $region29
    $region28: #{tpu_custom_call.1} parent=1 // pred_region
      _
    $region29: #{tpu_custom_call.1} parent=1 // pred_fallthru
      _
    // Predicated region
    $region30: #{tpu_custom_call.1} parent=1 // pred_check
      _
    $region31: #{tpu_custom_call.1} parent=1 // pred_check_branch
      %34 = sbr.rel (0) target = $region33
    $region32: #{tpu_custom_call.1} parent=1 // pred_region
      _
    $region33: #{tpu_custom_call.1} parent=1 // pred_fallthru
      _
    // Predicated region
    $region34: #{tpu_custom_call.1} parent=1 // pred_check
      _
    $region35: #{tpu_custom_call.1} parent=1 // pred_check_branch
      %36 = sbr.rel (0) target = $region37
    $region36: #{tpu_custom_call.1} parent=1 // pred_region
      _
    $region37: #{tpu_custom_call.1} parent=1 // pred_fallthru
      _
    // Predicated region
    $region38: #{tpu_custom_call.1} parent=1 // pred_check
      _
    $region39: #{tpu_custom_call.1} parent=1 // pred_check_branch
      %38 = sbr.rel (0) target = $region41
    $region40: #{tpu_custom_call.1} parent=1 // pred_region
      _
    $region41: #{tpu_custom_call.1} parent=1 // pred_fallthru
      _
    // Predicated region
    $region42: #{tpu_custom_call.1} parent=1 // pred_check
      _
    $region43: #{tpu_custom_call.1} parent=1 // pred_check_branch
      %40 = sbr.rel (0) target = $region45
    $region44: #{tpu_custom_call.1} parent=1 // pred_region
      _
    $region45: #{tpu_custom_call.1} parent=1 // pred_fallthru
      _
    // Predicated region
    $region46: #{tpu_custom_call.1} parent=1 // pred_check
      _
    $region47: #{tpu_custom_call.1} parent=1 // pred_check_branch
      %42 = sbr.rel (0) target = $region49
    $region48: #{tpu_custom_call.1} parent=1 // pred_region
      _
    $region49: #{tpu_custom_call.1} parent=1 // pred_fallthru
      _
    // Predicated region
    $region50: #{tpu_custom_call.1} parent=1 // pred_check
      _
    $region51: #{tpu_custom_call.1} parent=1 // pred_check_branch
      %44 = sbr.rel (0) target = $region53
    $region52: #{tpu_custom_call.1} parent=1 // pred_region
      _
    $region53: #{tpu_custom_call.1} parent=1 // pred_fallthru
      _
    %v45 = vld [vmem:[%s0] sm:$0xff]
    %v46 = vld [vmem:[%s0 + $0x8] sm:$0xff]
    %v47 = vld [vmem:[%s1] sm:$0x1]
    %v48 = vld [vmem:[%s2] sm:$0x1]
    %vm49 = vcmask 261120
    %v50 = vsel %vm49, %v45, 0.0
    %51 = vadd.xlane.f32.xlu0 %v50
    %v52 = vpop.xlane.xlu0 %51
    %v53 = vsel %vm49, %v46, 0.0
    %54 = vadd.xlane.f32.xlu0 %v53
    %v55 = vpop.xlane.xlu0 %54
    %v56 = vrcp.pop 32.0
    %v57 = vmul.f32 %v52, %v56
    %v58 = vmul.f32 %v55, %v56
    %v59 = vmul.f32 %v45, %v45
    %v60 = vmul.f32 %v46, %v46
    %v61 = vsel %vm49, %v59, 0.0
    %62 = vadd.xlane.f32.xlu0 %v61
    %v63 = vpop.xlane.xlu0 %62
    %v64 = vsel %vm49, %v60, 0.0
    %65 = vadd.xlane.f32.xlu0 %v64
    %v66 = vpop.xlane.xlu0 %65
    %v67 = vmul.f32 %v63, %v56
    %v68 = vmul.f32 %v66, %v56
    %v69 = vmul.f32 %v57, %v57
    %v70 = vmul.f32 %v58, %v58
    %v71 = vsub.f32 %v67, %v69
    %v72 = vsub.f32 %v68, %v70
    %v73 = vmax.f32 %v71, 0.0
    %v74 = vmax.f32 %v72, 0.0
    %v75 = vsub.f32 %v45, %v57
    %v76 = vsub.f32 %v46, %v58
    %v77 = vadd.f32 %v73, 1e-05
    %v78 = vadd.f32 %v74, 1e-05
    %v79 = vrsqrt.pop %v77
    %v80 = vrsqrt.pop %v78
    %v81 = vmul.f32 %v75, %v79
    %v82 = vmul.f32 %v76, %v80
    %v84 = vlaneseq
    %v85 = vshrl.u32 %v84, 7
    %v86 = vsub.s32 0, %v85
    %v87 = vrot.slane %v47, %v86
    %v89 = vmul.f32 %v81, %v87
    %v90 = vmul.f32 %v82, %v87
    %v92 = vlaneseq
    %v93 = vshrl.u32 %v92, 7
    %v94 = vsub.s32 0, %v93
    %v95 = vrot.slane %v48, %v94
    %v97 = vadd.f32 %v89, %v95
    %v98 = vadd.f32 %v90, %v95
    %v99 = vld [vmem:[%s5] sm:$0xff]
    %v100 = vld [vmem:[%s5 + $0x8] sm:$0xff]
    %v101 = vld [vmem:[%s6] sm:$0xff]
    %v102 = vld [vmem:[%s6 + $0x8] sm:$0xff]
    %104 = vset.pattern.permute.xlu0 0
    %105 = vperm.xlu0 %104, %v101
    %v106 = vpop.permute.xlu0 %105
    %109 = vset.pattern.permute.xlu0 0
    %110 = vperm.xlu0 %109, %v102
    %v111 = vpop.permute.xlu0 %110
    %vm113 = vcmask 64512
    %v115 = vsel %vm113, %v99, 0
    %v118 = vsel %vm113, %v100, 0
    %120 = vmatprep.subr.mxu0 0.0
    %121 = vmatpush1.msra.mxu0 %v97
    %122 = vmatprep.subr.mxu0 0.0
    %123 = vmatpush1.msra.mxu0 0.0
    %124 = vmatprep.subr.mxu0 0.0
    %125 = vmatpush1.msra.mxu0 0.0
    %126 = vmatprep.subr.mxu0 0.0
    %127 = vmatpush1.msra.mxu0 0.0
    %128 = vmatprep.subr.mxu0 0.0
    %129 = vmatpush1.msra.mxu0 0.0
    %130 = vmatprep.subr.mxu0 0.0
    %131 = vmatpush1.msra.mxu0 0.0
    %132 = vmatprep.subr.mxu0 0.0
    %133 = vmatpush1.msra.mxu0 0.0
    %134 = vmatprep.subr.mxu0 0.0
    %135 = vmatpush1.msra.mxu0 0.0
    %136 = vmatprep.subr.mxu0 0.0
    %137 = vmatpush1.msra.mxu0 0.0
    %138 = vmatprep.subr.mxu0 0.0
    %139 = vmatpush1.msra.mxu0 0.0
    %140 = vmatprep.subr.mxu0 0.0
    %141 = vmatpush1.msra.mxu0 0.0
    %142 = vmatprep.subr.mxu0 0.0
    %143 = vmatpush1.msra.mxu0 0.0
    %144 = vmatprep.subr.mxu0 0.0
    %145 = vmatpush1.msra.mxu0 0.0
    %146 = vmatprep.subr.mxu0 0.0
    %147 = vmatpush1.msra.mxu0 0.0
    %148 = vmatprep.subr.mxu0 0.0
    %149 = vmatpush1.msra.mxu0 0.0
    %150 = vmatprep.subr.mxu0 0.0
    %151 = vmatpush1.msra.mxu0 0.0
    %152 = vmatprep.subr.mxu0 0.0
    %153 = vmatpush1.msra.mxu0 0.0
    %154 = vmatprep.subr.mxu0 0.0
    %155 = vmatpush1.msra.mxu0 0.0
    %156 = vmatprep.subr.mxu0 0.0
    %157 = vmatpush1.msra.mxu0 0.0
    %158 = vmatprep.subr.mxu0 0.0
    %159 = vmatpush1.msra.mxu0 0.0
    %160 = vmatprep.subr.mxu0 0.0
    %161 = vmatpush1.msra.mxu0 0.0
    %162 = vmatprep.subr.mxu0 0.0
    %163 = vmatpush1.msra.mxu0 0.0
    %164 = vmatprep.subr.mxu0 0.0
    %165 = vmatpush1.msra.mxu0 0.0
    %166 = vmatprep.subr.mxu0 0.0
    %167 = vmatpush1.msra.mxu0 0.0
    %168 = vmatprep.subr.mxu0 0.0
    %169 = vmatpush1.msra.mxu0 0.0
    %170 = vmatprep.subr.mxu0 0.0
    %171 = vmatpush1.msra.mxu0 0.0
    %172 = vmatprep.subr.mxu0 0.0
    %173 = vmatpush1.msra.mxu0 0.0
    %174 = vmatprep.subr.mxu0 0.0
    %175 = vmatpush1.msra.mxu0 0.0
    %176 = vmatprep.subr.mxu0 0.0
    %177 = vmatpush1.msra.mxu0 0.0
    %178 = vmatprep.subr.mxu0 0.0
    %179 = vmatpush1.msra.mxu0 0.0
    %180 = vmatprep.subr.mxu0 0.0
    %181 = vmatpush1.msra.mxu0 0.0
    %182 = vmatprep.subr.mxu0 0.0
    %183 = vmatpush1.msra.mxu0 0.0
    %184 = vmatprep.mubr.f32.mxu0 0.0
    %185 = vmatmul.mubr.f32.gmra.mrb[0].mxu0 %v115
    %v186 = vpop.f32.mrb[0].mxu0
    %v187 = vadd.f32 %v106, %v186
    %v188 = vpop.f32.mrb[0].mxu0
    %189 = vmatprep.mubr.f32.mxu0 0.0
    %190 = vmatmul.mubr.f32.gmra.mrb[0].mxu0 %v118
    %v191 = vpop.f32.mrb[0].mxu0
    %v192 = vadd.f32 %v111, %v191
    %v193 = vpop.f32.mrb[0].mxu0
    %194 = vdwg.mxu0
    %195 = vmatprep.subr.mxu0 0.0
    %196 = vmatpush1.msra.mxu0 %v98
    %197 = vmatprep.subr.mxu0 0.0
    %198 = vmatpush1.msra.mxu0 0.0
    %199 = vmatprep.subr.mxu0 0.0
    %200 = vmatpush1.msra.mxu0 0.0
    %201 = vmatprep.subr.mxu0 0.0
    %202 = vmatpush1.msra.mxu0 0.0
    %203 = vmatprep.subr.mxu0 0.0
    %204 = vmatpush1.msra.mxu0 0.0
    %205 = vmatprep.subr.mxu0 0.0
    %206 = vmatpush1.msra.mxu0 0.0
    %207 = vmatprep.subr.mxu0 0.0
    %208 = vmatpush1.msra.mxu0 0.0
    %209 = vmatprep.subr.mxu0 0.0
    %210 = vmatpush1.msra.mxu0 0.0
    %211 = vmatprep.subr.mxu0 0.0
    %212 = vmatpush1.msra.mxu0 0.0
    %213 = vmatprep.subr.mxu0 0.0
    %214 = vmatpush1.msra.mxu0 0.0
    %215 = vmatprep.subr.mxu0 0.0
    %216 = vmatpush1.msra.mxu0 0.0
    %217 = vmatprep.subr.mxu0 0.0
    %218 = vmatpush1.msra.mxu0 0.0
    %219 = vmatprep.subr.mxu0 0.0
    %220 = vmatpush1.msra.mxu0 0.0
    %221 = vmatprep.subr.mxu0 0.0
    %222 = vmatpush1.msra.mxu0 0.0
    %223 = vmatprep.subr.mxu0 0.0
    %224 = vmatpush1.msra.mxu0 0.0
    %225 = vmatprep.subr.mxu0 0.0
    %226 = vmatpush1.msra.mxu0 0.0
    %227 = vmatprep.subr.mxu0 0.0
    %228 = vmatpush1.msra.mxu0 0.0
    %229 = vmatprep.subr.mxu0 0.0
    %230 = vmatpush1.msra.mxu0 0.0
    %231 = vmatprep.subr.mxu0 0.0
    %232 = vmatpush1.msra.mxu0 0.0
    %233 = vmatprep.subr.mxu0 0.0
    %234 = vmatpush1.msra.mxu0 0.0
    %235 = vmatprep.subr.mxu0 0.0
    %236 = vmatpush1.msra.mxu0 0.0
    %237 = vmatprep.subr.mxu0 0.0
    %238 = vmatpush1.msra.mxu0 0.0
    %239 = vmatprep.subr.mxu0 0.0
    %240 = vmatpush1.msra.mxu0 0.0
    %241 = vmatprep.subr.mxu0 0.0
    %242 = vmatpush1.msra.mxu0 0.0
    %243 = vmatprep.subr.mxu0 0.0
    %244 = vmatpush1.msra.mxu0 0.0
    %245 = vmatprep.subr.mxu0 0.0
    %246 = vmatpush1.msra.mxu0 0.0
    %247 = vmatprep.subr.mxu0 0.0
    %248 = vmatpush1.msra.mxu0 0.0
    %249 = vmatprep.subr.mxu0 0.0
    %250 = vmatpush1.msra.mxu0 0.0
    %251 = vmatprep.subr.mxu0 0.0
    %252 = vmatpush1.msra.mxu0 0.0
    %253 = vmatprep.subr.mxu0 0.0
    %254 = vmatpush1.msra.mxu0 0.0
    %255 = vmatprep.subr.mxu0 0.0
    %256 = vmatpush1.msra.mxu0 0.0
    %257 = vmatprep.subr.mxu0 0.0
    %258 = vmatpush1.msra.mxu0 0.0
    %259 = vmatprep.mubr.f32.mxu0 0.0
    %260 = vmatmul.mubr.f32.gmra.mrb[0].mxu0 %v115
    %v261 = vpop.f32.mrb[0].mxu0
    %v262 = vadd.f32 %v106, %v261
    %v263 = vpop.f32.mrb[0].mxu0
    %264 = vmatprep.mubr.f32.mxu0 0.0
    %265 = vmatmul.mubr.f32.gmra.mrb[0].mxu0 %v118
    %v266 = vpop.f32.mrb[0].mxu0
    %v267 = vadd.f32 %v111, %v266
    %v268 = vpop.f32.mrb[0].mxu0
    %269 = vdwg.mxu0
    %v270 = vmul.f32 %v187, 0.5
    %v271 = vmul.f32 %v192, 0.5
    %v272 = vmul.f32 %v262, 0.5
    %v273 = vmul.f32 %v267, 0.5
    %v274 = vrcp.pop 1.4142135
    %v275 = vmul.f32 %v187, %v274
    %v276 = vmul.f32 %v192, %v274
    %v277 = vmul.f32 %v262, %v274
    %v278 = vmul.f32 %v267, %v274
    %v279 = verf.f32.pop %v275
    %v280 = verf.f32.pop %v276
    %v281 = verf.f32.pop %v277
    %v282 = verf.f32.pop %v278
    %v283 = vadd.f32 %v279, 1.0
    %v284 = vadd.f32 %v280, 1.0
    %v285 = vadd.f32 %v281, 1.0
    %v286 = vadd.f32 %v282, 1.0
    %v287 = vmul.f32 %v270, %v283
    %v288 = vmul.f32 %v271, %v284
    %v289 = vmul.f32 %v272, %v285
    %v290 = vmul.f32 %v273, %v286
    %v291 = vld [vmem:[%s7] sm:$0xff]
    %vm292 = vcmask 130048
    %v294 = vsel %vm292, %v291, 0
    %296 = vmatprep.subr.mxu0 0.0
    %297 = vmatpush1.msra.mxu0 %v287
    %298 = vmatprep.subr.mxu0 0.0
    %299 = vmatpush1.msra.mxu0 %v288
    %300 = vmatprep.subr.mxu0 0.0
    %301 = vmatpush1.msra.mxu0 0.0
    %302 = vmatprep.subr.mxu0 0.0
    %303 = vmatpush1.msra.mxu0 0.0
    %304 = vmatprep.subr.mxu0 0.0
    %305 = vmatpush1.msra.mxu0 0.0
    %306 = vmatprep.subr.mxu0 0.0
    %307 = vmatpush1.msra.mxu0 0.0
    %308 = vmatprep.subr.mxu0 0.0
    %309 = vmatpush1.msra.mxu0 0.0
    %310 = vmatprep.subr.mxu0 0.0
    %311 = vmatpush1.msra.mxu0 0.0
    %312 = vmatprep.subr.mxu0 0.0
    %313 = vmatpush1.msra.mxu0 0.0
    %314 = vmatprep.subr.mxu0 0.0
    %315 = vmatpush1.msra.mxu0 0.0
    %316 = vmatprep.subr.mxu0 0.0
    %317 = vmatpush1.msra.mxu0 0.0
    %318 = vmatprep.subr.mxu0 0.0
    %319 = vmatpush1.msra.mxu0 0.0
    %320 = vmatprep.subr.mxu0 0.0
    %321 = vmatpush1.msra.mxu0 0.0
    %322 = vmatprep.subr.mxu0 0.0
    %323 = vmatpush1.msra.mxu0 0.0
    %324 = vmatprep.subr.mxu0 0.0
    %325 = vmatpush1.msra.mxu0 0.0
    %326 = vmatprep.subr.mxu0 0.0
    %327 = vmatpush1.msra.mxu0 0.0
    %328 = vmatprep.subr.mxu0 0.0
    %329 = vmatpush1.msra.mxu0 0.0
    %330 = vmatprep.subr.mxu0 0.0
    %331 = vmatpush1.msra.mxu0 0.0
    %332 = vmatprep.subr.mxu0 0.0
    %333 = vmatpush1.msra.mxu0 0.0
    %334 = vmatprep.subr.mxu0 0.0
    %335 = vmatpush1.msra.mxu0 0.0
    %336 = vmatprep.subr.mxu0 0.0
    %337 = vmatpush1.msra.mxu0 0.0
    %338 = vmatprep.subr.mxu0 0.0
    %339 = vmatpush1.msra.mxu0 0.0
    %340 = vmatprep.subr.mxu0 0.0
    %341 = vmatpush1.msra.mxu0 0.0
    %342 = vmatprep.subr.mxu0 0.0
    %343 = vmatpush1.msra.mxu0 0.0
    %344 = vmatprep.subr.mxu0 0.0
    %345 = vmatpush1.msra.mxu0 0.0
    %346 = vmatprep.subr.mxu0 0.0
    %347 = vmatpush1.msra.mxu0 0.0
    %348 = vmatprep.subr.mxu0 0.0
    %349 = vmatpush1.msra.mxu0 0.0
    %350 = vmatprep.subr.mxu0 0.0
    %351 = vmatpush1.msra.mxu0 0.0
    %352 = vmatprep.subr.mxu0 0.0
    %353 = vmatpush1.msra.mxu0 0.0
    %354 = vmatprep.subr.mxu0 0.0
    %355 = vmatpush1.msra.mxu0 0.0
    %356 = vmatprep.subr.mxu0 0.0
    %357 = vmatpush1.msra.mxu0 0.0
    %358 = vmatprep.subr.mxu0 0.0
    %359 = vmatpush1.msra.mxu0 0.0
    %360 = vmatprep.mubr.f32.mxu0 0.0
    %361 = vmatmul.mubr.f32.gmra.mrb[0].mxu0 %v294
    %v362 = vpop.f32.mrb[0].mxu0
    %v363 = vadd.f32 0.0, %v362
    %v364 = vpop.f32.mrb[0].mxu0
    %365 = vdwg.mxu0
    %366 = vmatprep.subr.mxu0 0.0
    %367 = vmatpush1.msra.mxu0 %v289
    %368 = vmatprep.subr.mxu0 0.0
    %369 = vmatpush1.msra.mxu0 %v290
    %370 = vmatprep.subr.mxu0 0.0
    %371 = vmatpush1.msra.mxu0 0.0
    %372 = vmatprep.subr.mxu0 0.0
    %373 = vmatpush1.msra.mxu0 0.0
    %374 = vmatprep.subr.mxu0 0.0
    %375 = vmatpush1.msra.mxu0 0.0
    %376 = vmatprep.subr.mxu0 0.0
    %377 = vmatpush1.msra.mxu0 0.0
    %378 = vmatprep.subr.mxu0 0.0
    %379 = vmatpush1.msra.mxu0 0.0
    %380 = vmatprep.subr.mxu0 0.0
    %381 = vmatpush1.msra.mxu0 0.0
    %382 = vmatprep.subr.mxu0 0.0
    %383 = vmatpush1.msra.mxu0 0.0
    %384 = vmatprep.subr.mxu0 0.0
    %385 = vmatpush1.msra.mxu0 0.0
    %386 = vmatprep.subr.mxu0 0.0
    %387 = vmatpush1.msra.mxu0 0.0
    %388 = vmatprep.subr.mxu0 0.0
    %389 = vmatpush1.msra.mxu0 0.0
    %390 = vmatprep.subr.mxu0 0.0
    %391 = vmatpush1.msra.mxu0 0.0
    %392 = vmatprep.subr.mxu0 0.0
    %393 = vmatpush1.msra.mxu0 0.0
    %394 = vmatprep.subr.mxu0 0.0
    %395 = vmatpush1.msra.mxu0 0.0
    %396 = vmatprep.subr.mxu0 0.0
    %397 = vmatpush1.msra.mxu0 0.0
    %398 = vmatprep.subr.mxu0 0.0
    %399 = vmatpush1.msra.mxu0 0.0
    %400 = vmatprep.subr.mxu0 0.0
    %401 = vmatpush1.msra.mxu0 0.0
    %402 = vmatprep.subr.mxu0 0.0
    %403 = vmatpush1.msra.mxu0 0.0
    %404 = vmatprep.subr.mxu0 0.0
    %405 = vmatpush1.msra.mxu0 0.0
    %406 = vmatprep.subr.mxu0 0.0
    %407 = vmatpush1.msra.mxu0 0.0
    %408 = vmatprep.subr.mxu0 0.0
    %409 = vmatpush1.msra.mxu0 0.0
    %410 = vmatprep.subr.mxu0 0.0
    %411 = vmatpush1.msra.mxu0 0.0
    %412 = vmatprep.subr.mxu0 0.0
    %413 = vmatpush1.msra.mxu0 0.0
    %414 = vmatprep.subr.mxu0 0.0
    %415 = vmatpush1.msra.mxu0 0.0
    %416 = vmatprep.subr.mxu0 0.0
    %417 = vmatpush1.msra.mxu0 0.0
    %418 = vmatprep.subr.mxu0 0.0
    %419 = vmatpush1.msra.mxu0 0.0
    %420 = vmatprep.subr.mxu0 0.0
    %421 = vmatpush1.msra.mxu0 0.0
    %422 = vmatprep.subr.mxu0 0.0
    %423 = vmatpush1.msra.mxu0 0.0
    %424 = vmatprep.subr.mxu0 0.0
    %425 = vmatpush1.msra.mxu0 0.0
    %426 = vmatprep.subr.mxu0 0.0
    %427 = vmatpush1.msra.mxu0 0.0
    %428 = vmatprep.subr.mxu0 0.0
    %429 = vmatpush1.msra.mxu0 0.0
    %430 = vmatprep.mubr.f32.mxu0 0.0
    %431 = vmatmul.mubr.f32.gmra.mrb[0].mxu0 %v294
    %v432 = vpop.f32.mrb[0].mxu0
    %v433 = vadd.f32 0.0, %v432
    %v434 = vpop.f32.mrb[0].mxu0
    %435 = vdwg.mxu0
    %v436 = vadd.f32 %v45, %v363
    %v437 = vadd.f32 %v46, %v433
    %v438 = vld [vmem:[%s8] sm:$0xff]
    %440 = vset.pattern.permute.xlu0 0
    %441 = vperm.xlu0 %440, %v438
    %v442 = vpop.permute.xlu0 %441
    %v444 = vadd.f32 %v436, %v442
    %v445 = vadd.f32 %v437, %v442
    %v446 = vld [vmem:[%s3] sm:$0x1]
    %v447 = vld [vmem:[%s4] sm:$0x1]
    %v448 = vsel %vm49, %v444, 0.0
    %449 = vadd.xlane.f32.xlu0 %v448
    %v450 = vpop.xlane.xlu0 %449
    %v451 = vsel %vm49, %v445, 0.0
    %452 = vadd.xlane.f32.xlu0 %v451
    %v453 = vpop.xlane.xlu0 %452
    %v454 = vmul.f32 %v450, %v56
    %v455 = vmul.f32 %v453, %v56
    %v456 = vmul.f32 %v444, %v444
    %v457 = vmul.f32 %v445, %v445
    %v458 = vsel %vm49, %v456, 0.0
    %459 = vadd.xlane.f32.xlu0 %v458
    %v460 = vpop.xlane.xlu0 %459
    %v461 = vsel %vm49, %v457, 0.0
    %462 = vadd.xlane.f32.xlu0 %v461
    %v463 = vpop.xlane.xlu0 %462
    %v464 = vmul.f32 %v460, %v56
    %v465 = vmul.f32 %v463, %v56
    %v466 = vmul.f32 %v454, %v454
    %v467 = vmul.f32 %v455, %v455
    %v468 = vsub.f32 %v464, %v466
    %v469 = vsub.f32 %v465, %v467
    %v470 = vmax.f32 %v468, 0.0
    %v471 = vmax.f32 %v469, 0.0
    %v472 = vsub.f32 %v444, %v454
    %v473 = vsub.f32 %v445, %v455
    %v474 = vadd.f32 %v470, 1e-05
    %v475 = vadd.f32 %v471, 1e-05
    %v476 = vrsqrt.pop %v474
    %v477 = vrsqrt.pop %v475
    %v478 = vmul.f32 %v472, %v476
    %v479 = vmul.f32 %v473, %v477
    %v481 = vlaneseq
    %v482 = vshrl.u32 %v481, 7
    %v483 = vsub.s32 0, %v482
    %v484 = vrot.slane %v446, %v483
    %v486 = vmul.f32 %v478, %v484
    %v487 = vmul.f32 %v479, %v484
    %v489 = vlaneseq
    %v490 = vshrl.u32 %v489, 7
    %v491 = vsub.s32 0, %v490
    %v492 = vrot.slane %v447, %v491
    %v494 = vadd.f32 %v486, %v492
    %v495 = vadd.f32 %v487, %v492
    %v496 = vld [vmem:[%s9] sm:$0xff]
    %v497 = vld [vmem:[%s9 + $0x8] sm:$0xff]
    %v498 = vld [vmem:[%s9 + $0x10] sm:$0xff]
    %v499 = vld [vmem:[%s9 + $0x18] sm:$0xff]
    %v500 = vld [vmem:[%s10] sm:$0x1]
    %v502 = vlaneseq
    %v503 = vshrl.u32 %v502, 7
    %v504 = vsub.s32 0, %v503
    %v505 = vrot.slane %v500, %v504
    %v508 = vsel %vm49, %v494, 0
    %v511 = vsel %vm49, %v495, 0
    %513 = vmatprep.subr.mxu0 0.0
    %514 = vmatpush1.msra.mxu0 %v496
    %515 = vmatprep.subr.mxu0 0.0
    %516 = vmatpush1.msra.mxu0 %v497
    %517 = vmatprep.subr.mxu0 0.0
    %518 = vmatpush1.msra.mxu0 %v498
    %519 = vmatprep.subr.mxu0 0.0
    %520 = vmatpush1.msra.mxu0 %v499
    %521 = vmatprep.subr.mxu0 0.0
    %522 = vmatpush1.msra.mxu0 0.0
    %523 = vmatprep.subr.mxu0 0.0
    %524 = vmatpush1.msra.mxu0 0.0
    %525 = vmatprep.subr.mxu0 0.0
    %526 = vmatpush1.msra.mxu0 0.0
    %527 = vmatprep.subr.mxu0 0.0
    %528 = vmatpush1.msra.mxu0 0.0
    %529 = vmatprep.subr.mxu0 0.0
    %530 = vmatpush1.msra.mxu0 0.0
    %531 = vmatprep.subr.mxu0 0.0
    %532 = vmatpush1.msra.mxu0 0.0
    %533 = vmatprep.subr.mxu0 0.0
    %534 = vmatpush1.msra.mxu0 0.0
    %535 = vmatprep.subr.mxu0 0.0
    %536 = vmatpush1.msra.mxu0 0.0
    %537 = vmatprep.subr.mxu0 0.0
    %538 = vmatpush1.msra.mxu0 0.0
    %539 = vmatprep.subr.mxu0 0.0
    %540 = vmatpush1.msra.mxu0 0.0
    %541 = vmatprep.subr.mxu0 0.0
    %542 = vmatpush1.msra.mxu0 0.0
    %543 = vmatprep.subr.mxu0 0.0
    %544 = vmatpush1.msra.mxu0 0.0
    %545 = vmatprep.subr.mxu0 0.0
    %546 = vmatpush1.msra.mxu0 0.0
    %547 = vmatprep.subr.mxu0 0.0
    %548 = vmatpush1.msra.mxu0 0.0
    %549 = vmatprep.subr.mxu0 0.0
    %550 = vmatpush1.msra.mxu0 0.0
    %551 = vmatprep.subr.mxu0 0.0
    %552 = vmatpush1.msra.mxu0 0.0
    %553 = vmatprep.subr.mxu0 0.0
    %554 = vmatpush1.msra.mxu0 0.0
    %555 = vmatprep.subr.mxu0 0.0
    %556 = vmatpush1.msra.mxu0 0.0
    %557 = vmatprep.subr.mxu0 0.0
    %558 = vmatpush1.msra.mxu0 0.0
    %559 = vmatprep.subr.mxu0 0.0
    %560 = vmatpush1.msra.mxu0 0.0
    %561 = vmatprep.subr.mxu0 0.0
    %562 = vmatpush1.msra.mxu0 0.0
    %563 = vmatprep.subr.mxu0 0.0
    %564 = vmatpush1.msra.mxu0 0.0
    %565 = vmatprep.subr.mxu0 0.0
    %566 = vmatpush1.msra.mxu0 0.0
    %567 = vmatprep.subr.mxu0 0.0
    %568 = vmatpush1.msra.mxu0 0.0
    %569 = vmatprep.subr.mxu0 0.0
    %570 = vmatpush1.msra.mxu0 0.0
    %571 = vmatprep.subr.mxu0 0.0
    %572 = vmatpush1.msra.mxu0 0.0
    %573 = vmatprep.subr.mxu0 0.0
    %574 = vmatpush1.msra.mxu0 0.0
    %575 = vmatprep.subr.mxu0 0.0
    %576 = vmatpush1.msra.mxu0 0.0
    %577 = vmatprep.mubr.f32.mxu0 0.0
    %578 = vmatmul.mubr.f32.gmra.mrb[0].mxu0 %v508
    %v579 = vpop.f32.mrb[0].mxu0
    %v580 = vadd.f32 %v505, %v579
    %v581 = vpop.f32.mrb[0].mxu0
    %582 = vmatprep.mubr.f32.mxu0 0.0
    %583 = vmatmul.mubr.f32.gmra.mrb[0].mxu0 %v511
    %v584 = vpop.f32.mrb[0].mxu0
    %v585 = vadd.f32 %v505, %v584
    %v586 = vpop.f32.mrb[0].mxu0
    %587 = vdwg.mxu0
    %v588 = vmul.f32 %v580, 0.5
    %v589 = vmul.f32 %v585, 0.5
    %v590 = vmul.f32 %v580, %v274
    %v591 = vmul.f32 %v585, %v274
    %v592 = verf.f32.pop %v590
    %v593 = verf.f32.pop %v591
    %v594 = vadd.f32 %v592, 1.0
    %v595 = vadd.f32 %v593, 1.0
    %v596 = vmul.f32 %v588, %v594
    %v597 = vmul.f32 %v589, %v595
    %v598 = vld [vmem:[%s11] sm:$0xff]
    %v599 = vld [vmem:[%s11 + $0x8] sm:$0xff]
    %v600 = vld [vmem:[%s11 + $0x10] sm:$0xff]
    %v601 = vld [vmem:[%s11 + $0x18] sm:$0xff]
    %v602 = vld [vmem:[%s11 + $0x20] sm:$0xff]
    %v603 = vld [vmem:[%s11 + $0x28] sm:$0xff]
    %v604 = vld [vmem:[%s11 + $0x30] sm:$0xff]
    %v605 = vld [vmem:[%s11 + $0x38] sm:$0xff]
    %v606 = vld [vmem:[%s12] sm:$0x1]
    %v608 = vlaneseq
    %v609 = vshrl.u32 %v608, 7
    %v610 = vsub.s32 0, %v609
    %v611 = vrot.slane %v606, %v610
    %vm613 = vcmask 523264
    %v615 = vsel %vm613, %v596, 0
    %v618 = vsel %vm613, %v597, 0
    %620 = vmatprep.subr.mxu0 0.0
    %621 = vmatpush1.msra.mxu0 %v598
    %622 = vmatprep.subr.mxu0 0.0
    %623 = vmatpush1.msra.mxu0 %v599
    %624 = vmatprep.subr.mxu0 0.0
    %625 = vmatpush1.msra.mxu0 %v600
    %626 = vmatprep.subr.mxu0 0.0
    %627 = vmatpush1.msra.mxu0 %v601
    %628 = vmatprep.subr.mxu0 0.0
    %629 = vmatpush1.msra.mxu0 %v602
    %630 = vmatprep.subr.mxu0 0.0
    %631 = vmatpush1.msra.mxu0 %v603
    %632 = vmatprep.subr.mxu0 0.0
    %633 = vmatpush1.msra.mxu0 %v604
    %634 = vmatprep.subr.mxu0 0.0
    %635 = vmatpush1.msra.mxu0 %v605
    %636 = vmatprep.subr.mxu0 0.0
    %637 = vmatpush1.msra.mxu0 0.0
    %638 = vmatprep.subr.mxu0 0.0
    %639 = vmatpush1.msra.mxu0 0.0
    %640 = vmatprep.subr.mxu0 0.0
    %641 = vmatpush1.msra.mxu0 0.0
    %642 = vmatprep.subr.mxu0 0.0
    %643 = vmatpush1.msra.mxu0 0.0
    %644 = vmatprep.subr.mxu0 0.0
    %645 = vmatpush1.msra.mxu0 0.0
    %646 = vmatprep.subr.mxu0 0.0
    %647 = vmatpush1.msra.mxu0 0.0
    %648 = vmatprep.subr.mxu0 0.0
    %649 = vmatpush1.msra.mxu0 0.0
    %650 = vmatprep.subr.mxu0 0.0
    %651 = vmatpush1.msra.mxu0 0.0
    %652 = vmatprep.subr.mxu0 0.0
    %653 = vmatpush1.msra.mxu0 0.0
    %654 = vmatprep.subr.mxu0 0.0
    %655 = vmatpush1.msra.mxu0 0.0
    %656 = vmatprep.subr.mxu0 0.0
    %657 = vmatpush1.msra.mxu0 0.0
    %658 = vmatprep.subr.mxu0 0.0
    %659 = vmatpush1.msra.mxu0 0.0
    %660 = vmatprep.subr.mxu0 0.0
    %661 = vmatpush1.msra.mxu0 0.0
    %662 = vmatprep.subr.mxu0 0.0
    %663 = vmatpush1.msra.mxu0 0.0
    %664 = vmatprep.subr.mxu0 0.0
    %665 = vmatpush1.msra.mxu0 0.0
    %666 = vmatprep.subr.mxu0 0.0
    %667 = vmatpush1.msra.mxu0 0.0
    %668 = vmatprep.subr.mxu0 0.0
    %669 = vmatpush1.msra.mxu0 0.0
    %670 = vmatprep.subr.mxu0 0.0
    %671 = vmatpush1.msra.mxu0 0.0
    %672 = vmatprep.subr.mxu0 0.0
    %673 = vmatpush1.msra.mxu0 0.0
    %674 = vmatprep.subr.mxu0 0.0
    %675 = vmatpush1.msra.mxu0 0.0
    %676 = vmatprep.subr.mxu0 0.0
    %677 = vmatpush1.msra.mxu0 0.0
    %678 = vmatprep.subr.mxu0 0.0
    %679 = vmatpush1.msra.mxu0 0.0
    %680 = vmatprep.subr.mxu0 0.0
    %681 = vmatpush1.msra.mxu0 0.0
    %682 = vmatprep.subr.mxu0 0.0
    %683 = vmatpush1.msra.mxu0 0.0
    %684 = vmatprep.mubr.f32.mxu0 0.0
    %685 = vmatmul.mubr.f32.gmra.mrb[0].mxu0 %v615
    %v686 = vpop.f32.mrb[0].mxu0
    %v687 = vadd.f32 %v611, %v686
    %v688 = vpop.f32.mrb[0].mxu0
    %689 = vmatprep.mubr.f32.mxu0 0.0
    %690 = vmatmul.mubr.f32.gmra.mrb[0].mxu0 %v618
    %v691 = vpop.f32.mrb[0].mxu0
    %v692 = vadd.f32 %v611, %v691
    %v693 = vpop.f32.mrb[0].mxu0
    %694 = vdwg.mxu0
    %v695 = vadd.f32 %v444, %v687
    %v696 = vadd.f32 %v445, %v692
    %697 = vst.msk [vmem:[#allocation2] sm:$0xff] %vm49, %v695
    %698 = vst.msk [vmem:[#allocation2 + $0x8] sm:$0xff] %vm49, %v696
    // Predicated region
    $region54: #{tpu_custom_call.1} parent=1 // pred_check
      _
    $region55: #{tpu_custom_call.1} parent=1 // pred_check_branch
      %700 = sbr.rel (0) target = $region57
    $region56: #{tpu_custom_call.1} parent=1 // pred_region
      %s702 = ssub.s32 256, 256
      %703 = vsyncadd [#allocation3], %s702
      %s704 = sshll.u32 [#allocation2], 4
      %s705 = int_to_ptr.vmem [resolvable:$true] %s704
      %710 = dma.vmem_to_hbm [thread:$0]  %s705, 256, %s13, [#allocation3], 128, 128, 8
    $region57: #{tpu_custom_call.1} parent=1 // pred_fallthru
      _
    // Predicated region
    $region58: #{tpu_custom_call.1} parent=1 // pred_check
      _
    $region59: #{tpu_custom_call.1} parent=1 // pred_check_branch
      %712 = sbr.rel (0) target = $region61
    $region60: #{tpu_custom_call.1} parent=1 // pred_region
      %713 = dma.done [#allocation3], 256
    $region61: #{tpu_custom_call.1} parent=1 // pred_fallthru
      _
    %714 = vsyncpa [#allocation3], 1

</llo_original>
